<compile_context>
chip_gen: v7x
topology: tpu7x:2x2x1
jax: 0.10.0
libtpu: 0.0.40
codegen_flags: <defaults>
</compile_context>

<pallas_src>
import functools

import jax
import jax.numpy as jnp
import numpy as np
from jax import lax
from jax.experimental import pallas as pl
from jax.experimental.pallas import tpu as pltpu


# --------------------------------------------------------------------------- #
# Kernel
# --------------------------------------------------------------------------- #
def _rwa_kernel(act_ref,                    # (t_blk, b_blk, 3*D) fused [u | gx | ax]
                wh_ref,                     # (D, 2*D) bf16 fused [Wg_h | Wa_h]
                s0_ref,                     # (1, D) f32
                y_ref,                      # (t_blk, b_blk, D) f32 output slab
                num_ref, den_ref, h_ref, amax_ref):   # VMEM state (b_blk, D) f32
    t_blk = act_ref.shape[0]
    d = y_ref.shape[-1]

    # Re-initialize the recurrent state at the first time block of each batch
    # block (time axis is grid axis 1).
    @pl.when(pl.program_id(1) == 0)
    def _init():
        h_ref[...] = jnp.tanh(
            jnp.broadcast_to(s0_ref[...].astype(jnp.float32), h_ref.shape))
        num_ref[...] = jnp.zeros_like(num_ref)
        den_ref[...] = jnp.zeros_like(den_ref)
        amax_ref[...] = jnp.full_like(amax_ref, 1e-38)

    wh = wh_ref[...]                        # bf16 recurrent weight, loop-invariant

    def step(i, carry):
        num, den, h, amax = carry
        row = act_ref[i].astype(jnp.float32)        # (b_blk, 3*D)
        ui = row[:, :d]                             # x @ Wu   + bu
        gx = row[:, d:2 * d]                        # x @ Wg_x + bg
        ax = row[:, 2 * d:]                         # x @ Wa_x
        # Single fused recurrent matmul (bf16 operands, f32 accumulation) on
        # the serial critical path.
        hh = jnp.dot(h.astype(jnp.bfloat16), wh,
                     preferred_element_type=jnp.float32)   # (b_blk, 2*D)
        g = gx + hh[:, :d]
        a = ax + hh[:, d:]
        z = ui * jnp.tanh(g)
        a_max = jnp.maximum(a, amax)
        e_to_a = jnp.exp(a_max - amax)
        num = num + z * e_to_a
        den = den + e_to_a
        # EUP approximate reciprocal + one Newton step (~f32-exact, off VPU).
        inv = pl.reciprocal(den, approx=True)
        inv = inv * (2.0 - den * inv)
        h_new = jnp.tanh(num * inv)
        y_ref[i] = h_new.astype(y_ref.dtype)
        return num, den, h_new, a_max

    carry0 = (num_ref[...], den_ref[...], h_ref[...], amax_ref[...])
    num, den, h, amax = lax.fori_loop(0, t_blk, step, carry0,
                                      unroll=min(int(t_blk), 8))

    num_ref[...] = num
    den_ref[...] = den
    h_ref[...] = h
    amax_ref[...] = amax


# --------------------------------------------------------------------------- #
# Sizing helpers
# --------------------------------------------------------------------------- #
def _round_up(x, m):
    return ((x + m - 1) // m) * m


def _vmem_capacity_bytes():
    try:
        info = pltpu.get_tpu_info()
        for attr in ("vmem_capacity_bytes", "vmem_bytes", "vmem_size_bytes"):
            v = getattr(info, attr, None)
            if v:
                return int(v)
    except Exception:
        pass
    return 64 * 1024 * 1024          # conservative (v7x per-TensorCore VMEM)


def _pick_time_block(T, cap):
    """Largest divisor of T that is <= cap (capped at 256 steps per block)."""
    cap = max(1, min(int(cap), T, 256))
    best = 1
    for c in range(1, cap + 1):
        if T % c == 0:
            best = c
    return best


# --------------------------------------------------------------------------- #
# Wrapper
# --------------------------------------------------------------------------- #
def rwa_pallas(x, params, *, stream_dtype=jnp.float32, single_buffer_weights=True):
    """x: (B, T, D_in) float32 -> (B, T, D_out) float32."""
    wu, bu, wg, bg, wa, s0 = params
    B, T, D_in = x.shape
    D_out = wu.shape[1]

    d_pad = _round_up(D_out, 128)            # lane-dense D
    b_pad = _round_up(B, 8)                  # sublane-dense B (f32)

    # Split the concat-weights of the PyTorch Linear layers into x- and h-parts.
    wgx, wgh = wg[:D_in], wg[D_in:]
    wax, wah = wa[:D_in], wa[D_in:]

    pad_c = lambda w: jnp.pad(w, ((0, 0), (0, d_pad - D_out)))
    pad_v = lambda v: jnp.pad(v, (0, d_pad - D_out))
    wu_p, wgx_p, wax_p = pad_c(wu), pad_c(wgx), pad_c(wax)
    bu_p, bg_p = pad_v(bu), pad_v(bg)
    wgh_p = jnp.pad(wgh, ((0, d_pad - D_out), (0, d_pad - D_out)))
    wah_p = jnp.pad(wah, ((0, d_pad - D_out), (0, d_pad - D_out)))
    s0_p = pad_v(s0)
    x_p = jnp.pad(x, ((0, b_pad - B), (0, 0), (0, 0)))

    # Hoisted x-only projections: transpose the SMALL x once to time-major and
    # run one (T*B, D_in) x (D_in, 3*D) GEMM -> fused [u | gx | ax] slab.
    wx = jnp.concatenate([wu_p, wgx_p, wax_p], axis=1)               # (D_in, 3*D)
    bx = jnp.concatenate([bu_p, bg_p, jnp.zeros((d_pad,), jnp.float32)], axis=0)
    x_tm = jnp.transpose(x_p, (1, 0, 2))                             # (T, B, D_in)
    proj = jnp.dot(x_tm.reshape(T * b_pad, D_in), wx,
                   preferred_element_type=jnp.float32) + bx
    act = proj.reshape(T, b_pad, 3 * d_pad).astype(stream_dtype)

    # Fused recurrent weight, stored/streamed in bf16 (f32 accumulation in-kernel).
    wh = jnp.concatenate([wgh_p, wah_p], axis=1).astype(jnp.bfloat16)  # (D, 2*D)
    s0_2d = s0_p.reshape(1, d_pad).astype(jnp.float32)

    # ----- generation-aware sizing -------------------------------------------------
    vmem_cap = _vmem_capacity_bytes()
    vmem_limit = max(int(min(vmem_cap - 8 * 2**20, 0.9 * vmem_cap)), 32 * 2**20)

    # Split large batches across 2 blocks (v7x dual-TensorCore via "parallel").
    n_b = 2 if (b_pad >= 16 and b_pad % 16 == 0) else 1
    b_blk = b_pad // n_b

    act_itemsize = jnp.dtype(stream_dtype).itemsize
    per_t = 2 * (3 * b_blk * d_pad * act_itemsize) + 2 * (b_blk * d_pad * 4)
    fixed = (wh.size * 2 + d_pad * 4                 # weights + s0
             + 4 * b_blk * d_pad * 4                 # state scratch
             + 2 * 2**20)                            # headroom for internals
    t_blk = _pick_time_block(T, (vmem_limit - fixed) // max(per_t, 1))
    grid = (n_b, T // t_blk)

    act_spec = pl.BlockSpec((t_blk, b_blk, 3 * d_pad), lambda b, t: (t, b, 0))
    out_spec = pl.BlockSpec((t_blk, b_blk, d_pad), lambda b, t: (t, b, 0))
    weight_kw = {"pipeline_mode": pl.Buffered(1)} if single_buffer_weights else {}
    wh_spec = pl.BlockSpec((d_pad, 2 * d_pad), lambda b, t: (0, 0), **weight_kw)
    s0_spec = pl.BlockSpec((1, d_pad), lambda b, t: (0, 0), **weight_kw)

    grid_spec = pltpu.PrefetchScalarGridSpec(
        num_scalar_prefetch=0,
        grid=grid,
        in_specs=[act_spec, wh_spec, s0_spec],
        out_specs=out_spec,
        scratch_shapes=[
            pltpu.VMEM((b_blk, d_pad), jnp.float32),   # numerator
            pltpu.VMEM((b_blk, d_pad), jnp.float32),   # denominator
            pltpu.VMEM((b_blk, d_pad), jnp.float32),   # last_h
            pltpu.VMEM((b_blk, d_pad), jnp.float32),   # last_a_max
        ],
    )

    y_tm = pl.pallas_call(
        _rwa_kernel,
        out_shape=jax.ShapeDtypeStruct((T, b_pad, d_pad), jnp.float32),
        grid_spec=grid_spec,
        compiler_params=pltpu.CompilerParams(
            dimension_semantics=("parallel", "arbitrary"),   # batch ||, time serial
            vmem_limit_bytes=vmem_limit),
    )(act, wh, s0_2d)

    # Back to the PyTorch batch-major convention (and strip padding).
    # TODO(synk): if the consumer accepts time-major output, drop this transpose.
    return jnp.transpose(y_tm[:, :B, :D_out], (1, 0, 2))


# --------------------------------------------------------------------------- #
# Pure-JAX reference mirroring the PyTorch forward exactly
# --------------------------------------------------------------------------- #
def rwa_reference(x, params):
    wu, bu, wg, bg, wa, s0 = params
    B, T, D_in = x.shape
    D_out = wu.shape[1]
    h = jnp.tanh(jnp.broadcast_to(s0, (B, D_out)))
    num = jnp.zeros((B, D_out), jnp.float32)
    den = jnp.zeros((B, D_out), jnp.float32)
    amax = jnp.ones((B, D_out), jnp.float32) * 1e-38
    U = jnp.einsum("btd,de->bte", x, wu) + bu
    outs = []
    for t in range(T):
        xi = x[:, t]
        ui = U[:, t]
        xh = jnp.concatenate([xi, h], axis=1)
        z = ui * jnp.tanh(xh @ wg + bg)
        a = xh @ wa
        a_max = jnp.maximum(a, amax)
        e = jnp.exp(a_max - amax)
        num = num + z * e
        den = den + e
        h = jnp.tanh(num / den)
        amax = a_max
        outs.append(h)
    return jnp.stack(outs, axis=1)


def init_params(key, D_in, D_out):
    k = jax.random.split(key, 6)
    scale = 0.1
    wu = scale * jax.random.normal(k[0], (D_in, D_out), jnp.float32)          # _u.weight^T
    bu = scale * jax.random.normal(k[1], (D_out,), jnp.float32)               # _u.bias
    wg = scale * jax.random.normal(k[2], (D_in + D_out, D_out), jnp.float32)  # _g.weight^T
    bg = scale * jax.random.normal(k[3], (D_out,), jnp.float32)               # _g.bias
    wa = scale * jax.random.normal(k[4], (D_in + D_out, D_out), jnp.float32)  # _a.weight^T
    s0 = scale * jax.random.normal(k[5], (D_out,), jnp.float32)               # s0
    return wu, bu, wg, bg, wa, s0


if __name__ == "__main__":
    B, T, D_in, D_out = 2, 8, 16, 32
    key = jax.random.PRNGKey(0)
    kx, kp = jax.random.split(key)
    x = jax.random.normal(kx, (B, T, D_in), jnp.float32)
    params = init_params(kp, D_in, D_out)

    run_sb = jax.jit(functools.partial(rwa_pallas, single_buffer_weights=True))
    run_db = jax.jit(functools.partial(rwa_pallas, single_buffer_weights=False))
    try:
        y = jax.block_until_ready(run_sb(x, params))
    except Exception:
        # Fallback for JAX builds without pipeline_mode support on TPU BlockSpecs.
        y = jax.block_until_ready(run_db(x, params))

    y_ref = jax.block_until_ready(rwa_reference(x, params))

    # bf16 recurrent matmul (f32 accumulate) + Newton-refined EUP reciprocal:
    # error stays well inside 5e-3 for this shape/seed.
    np.testing.assert_allclose(np.asarray(y), np.asarray(y_ref),
                               rtol=5e-3, atol=5e-3)
    print("KERNEL_OK")
</pallas_src>

<mosaic_0001>
module attributes {stable_mosaic.version = 11 : i64} {
  func.func @_rwa_kernel(%arg0: i32, %arg1: i32, %arg2: memref<8x8x384xf32, #tpu.memory_space<vmem>>, %arg3: memref<128x256xbf16, #tpu.memory_space<vmem>>, %arg4: memref<1x128xf32, #tpu.memory_space<vmem>>, %arg5: memref<8x8x128xf32, #tpu.memory_space<vmem>>, %arg6: memref<8x128xf32, #tpu.memory_space<vmem>>, %arg7: memref<8x128xf32, #tpu.memory_space<vmem>>, %arg8: memref<8x128xf32, #tpu.memory_space<vmem>>, %arg9: memref<8x128xf32, #tpu.memory_space<vmem>>) attributes {dimension_semantics = [#tpu.dimension_semantics<parallel>, #tpu.dimension_semantics<arbitrary>], iteration_bounds = array<i64: 1, 1>, scalar_prefetch = 0 : i64, scratch_operands = 4 : i64, tpu.core_type = #tpu.core_type<tc>, window_params = [{transform_indices = @transform_0, window_bounds = array<i64: 8, 8, 384>}, {pipeline_mode = #tpu.pipeline_mode<synchronous>, transform_indices = @transform_1, window_bounds = array<i64: 128, 256>}, {pipeline_mode = #tpu.pipeline_mode<synchronous>, transform_indices = @transform_2, window_bounds = array<i64: 1, 128>}, {transform_indices = @transform_3, window_bounds = array<i64: 8, 8, 128>}]} {
    %c0_i32 = arith.constant 0 : i32
    %0 = arith.cmpi eq, %arg1, %c0_i32 : i32
    %1 = arith.extui %0 : i1 to i32
    %c0_i32_0 = arith.constant 0 : i32
    %2 = arith.cmpi ne, %1, %c0_i32_0 : i32
    scf.if %2 {
      %c0_66 = arith.constant 0 : index
      %c0_67 = arith.constant 0 : index
      %260 = vector.load %arg4[%c0_66, %c0_67] : memref<1x128xf32, #tpu.memory_space<vmem>>, vector<1x128xf32>
      %261 = vector.shape_cast %260 : vector<1x128xf32> to vector<1x128xf32>
      %262 = vector.broadcast %261 : vector<1x128xf32> to vector<8x128xf32>
      %263 = math.tanh %262 : vector<8x128xf32>
      %c0_68 = arith.constant 0 : index
      %c0_69 = arith.constant 0 : index
      %264 = vector.load %arg8[%c0_68, %c0_69] : memref<8x128xf32, #tpu.memory_space<vmem>>, vector<8x128xf32>
      tpu.vector_store %arg8[%c0_68, %c0_69], %263 {strides = array<i32>} : memref<8x128xf32, #tpu.memory_space<vmem>>, vector<8x128xf32>,
      %cst_70 = arith.constant 0.000000e+00 : f32
      %265 = vector.broadcast %cst_70 : f32 to vector<8x128xf32>
      %c0_71 = arith.constant 0 : index
      %c0_72 = arith.constant 0 : index
      %266 = vector.load %arg6[%c0_71, %c0_72] : memref<8x128xf32, #tpu.memory_space<vmem>>, vector<8x128xf32>
      tpu.vector_store %arg6[%c0_71, %c0_72], %265 {strides = array<i32>} : memref<8x128xf32, #tpu.memory_space<vmem>>, vector<8x128xf32>,
      %cst_73 = arith.constant 0.000000e+00 : f32
      %267 = vector.broadcast %cst_73 : f32 to vector<8x128xf32>
      %c0_74 = arith.constant 0 : index
      %c0_75 = arith.constant 0 : index
      %268 = vector.load %arg7[%c0_74, %c0_75] : memref<8x128xf32, #tpu.memory_space<vmem>>, vector<8x128xf32>
      tpu.vector_store %arg7[%c0_74, %c0_75], %267 {strides = array<i32>} : memref<8x128xf32, #tpu.memory_space<vmem>>, vector<8x128xf32>,
      %cst_76 = arith.constant 9.99999935E-39 : f32
      %269 = vector.broadcast %cst_76 : f32 to vector<8x128xf32>
      %c0_77 = arith.constant 0 : index
      %c0_78 = arith.constant 0 : index
      %270 = vector.load %arg9[%c0_77, %c0_78] : memref<8x128xf32, #tpu.memory_space<vmem>>, vector<8x128xf32>
      tpu.vector_store %arg9[%c0_77, %c0_78], %269 {strides = array<i32>} : memref<8x128xf32, #tpu.memory_space<vmem>>, vector<8x128xf32>,
    } else {
    }
    %c0 = arith.constant 0 : index
    %c0_1 = arith.constant 0 : index
    %3 = vector.load %arg3[%c0, %c0_1] : memref<128x256xbf16, #tpu.memory_space<vmem>>, vector<128x256xbf16>
    %c0_2 = arith.constant 0 : index
    %c0_3 = arith.constant 0 : index
    %4 = vector.load %arg6[%c0_2, %c0_3] : memref<8x128xf32, #tpu.memory_space<vmem>>, vector<8x128xf32>
    %c0_4 = arith.constant 0 : index
    %c0_5 = arith.constant 0 : index
    %5 = vector.load %arg7[%c0_4, %c0_5] : memref<8x128xf32, #tpu.memory_space<vmem>>, vector<8x128xf32>
    %c0_6 = arith.constant 0 : index
    %c0_7 = arith.constant 0 : index
    %6 = vector.load %arg8[%c0_6, %c0_7] : memref<8x128xf32, #tpu.memory_space<vmem>>, vector<8x128xf32>
    %c0_8 = arith.constant 0 : index
    %c0_9 = arith.constant 0 : index
    %7 = vector.load %arg9[%c0_8, %c0_9] : memref<8x128xf32, #tpu.memory_space<vmem>>, vector<8x128xf32>
    %c0_i32_10 = arith.constant 0 : i32
    %8 = arith.index_cast %c0_i32_10 : i32 to index
    %c0_11 = arith.constant 0 : index
    %c0_12 = arith.constant 0 : index
    %9 = vector.load %arg2[%8, %c0_11, %c0_12] : memref<8x8x384xf32, #tpu.memory_space<vmem>>, vector<1x8x384xf32>
    %10 = vector.shape_cast %9 : vector<1x8x384xf32> to vector<8x384xf32>
    %11 = vector.extract_strided_slice %10 {offsets = [0, 0], sizes = [8, 128], strides = [1, 1]} : vector<8x384xf32> to vector<8x128xf32>
    %12 = vector.extract_strided_slice %10 {offsets = [0, 128], sizes = [8, 128], strides = [1, 1]} : vector<8x384xf32> to vector<8x128xf32>
    %13 = vector.extract_strided_slice %10 {offsets = [0, 256], sizes = [8, 128], strides = [1, 1]} : vector<8x384xf32> to vector<8x128xf32>
    %14 = arith.truncf %6 : vector<8x128xf32> to vector<8x128xbf16>
    %cst = arith.constant dense<0.000000e+00> : vector<8x256xf32>
    %15 = tpu.matmul %14, %3, %cst {dimension_numbers = #tpu.dot_dimension_numbers<[1], [0], [0], [1], [0, 0, 1, 1], [], []>} : vector<8x128xbf16>, vector<128x256xbf16>, vector<8x256xf32> -> vector<8x256xf32>
    %16 = vector.extract_strided_slice %15 {offsets = [0, 0], sizes = [8, 128], strides = [1, 1]} : vector<8x256xf32> to vector<8x128xf32>
    %17 = arith.addf %12, %16 : vector<8x128xf32>
    %18 = vector.extract_strided_slice %15 {offsets = [0, 128], sizes = [8, 128], strides = [1, 1]} : vector<8x256xf32> to vector<8x128xf32>
    %19 = arith.addf %13, %18 : vector<8x128xf32>
    %20 = math.tanh %17 : vector<8x128xf32>
    %21 = arith.mulf %11, %20 : vector<8x128xf32>
    %22 = arith.maximumf %19, %7 : vector<8x128xf32>
    %23 = arith.subf %22, %7 : vector<8x128xf32>
    %24 = math.exp %23 : vector<8x128xf32>
    %25 = arith.mulf %21, %24 : vector<8x128xf32>
    %26 = arith.addf %4, %25 : vector<8x128xf32>
    %27 = arith.addf %5, %24 : vector<8x128xf32>
    %28 = tpu.reciprocal %27 {approx = true} : vector<8x128xf32> -> vector<8x128xf32>
    %29 = arith.mulf %27, %28 : vector<8x128xf32>
    %cst_13 = arith.constant 2.000000e+00 : f32
    %30 = vector.broadcast %cst_13 : f32 to vector<8x128xf32>
    %31 = arith.subf %30, %29 : vector<8x128xf32>
    %32 = arith.mulf %28, %31 : vector<8x128xf32>
    %33 = arith.mulf %26, %32 : vector<8x128xf32>
    %34 = math.tanh %33 : vector<8x128xf32>
    %35 = arith.index_cast %c0_i32_10 : i32 to index
    %c0_14 = arith.constant 0 : index
    %c0_15 = arith.constant 0 : index
    %36 = vector.load %arg5[%35, %c0_14, %c0_15] : memref<8x8x128xf32, #tpu.memory_space<vmem>>, vector<1x8x128xf32>
    %37 = vector.shape_cast %36 : vector<1x8x128xf32> to vector<8x128xf32>
    %38 = vector.shape_cast %34 : vector<8x128xf32> to vector<1x8x128xf32>
    tpu.vector_store %arg5[%35, %c0_14, %c0_15], %38 {strides = array<i32>} : memref<8x8x128xf32, #tpu.memory_space<vmem>>, vector<1x8x128xf32>,
    %c1_i32 = arith.constant 1 : i32
    %39 = arith.index_cast %c1_i32 : i32 to index
    %c0_16 = arith.constant 0 : index
    %c0_17 = arith.constant 0 : index
    %40 = vector.load %arg2[%39, %c0_16, %c0_17] : memref<8x8x384xf32, #tpu.memory_space<vmem>>, vector<1x8x384xf32>
    %41 = vector.shape_cast %40 : vector<1x8x384xf32> to vector<8x384xf32>
    %42 = vector.extract_strided_slice %41 {offsets = [0, 0], sizes = [8, 128], strides = [1, 1]} : vector<8x384xf32> to vector<8x128xf32>
    %43 = vector.extract_strided_slice %41 {offsets = [0, 128], sizes = [8, 128], strides = [1, 1]} : vector<8x384xf32> to vector<8x128xf32>
    %44 = vector.extract_strided_slice %41 {offsets = [0, 256], sizes = [8, 128], strides = [1, 1]} : vector<8x384xf32> to vector<8x128xf32>
    %45 = arith.truncf %34 : vector<8x128xf32> to vector<8x128xbf16>
    %cst_18 = arith.constant dense<0.000000e+00> : vector<8x256xf32>
    %46 = tpu.matmul %45, %3, %cst_18 {dimension_numbers = #tpu.dot_dimension_numbers<[1], [0], [0], [1], [0, 0, 1, 1], [], []>} : vector<8x128xbf16>, vector<128x256xbf16>, vector<8x256xf32> -> vector<8x256xf32>
    %47 = vector.extract_strided_slice %46 {offsets = [0, 0], sizes = [8, 128], strides = [1, 1]} : vector<8x256xf32> to vector<8x128xf32>
    %48 = arith.addf %43, %47 : vector<8x128xf32>
    %49 = vector.extract_strided_slice %46 {offsets = [0, 128], sizes = [8, 128], strides = [1, 1]} : vector<8x256xf32> to vector<8x128xf32>
    %50 = arith.addf %44, %49 : vector<8x128xf32>
    %51 = math.tanh %48 : vector<8x128xf32>
    %52 = arith.mulf %42, %51 : vector<8x128xf32>
    %53 = arith.maximumf %50, %22 : vector<8x128xf32>
    %54 = arith.subf %53, %22 : vector<8x128xf32>
    %55 = math.exp %54 : vector<8x128xf32>
    %56 = arith.mulf %52, %55 : vector<8x128xf32>
    %57 = arith.addf %26, %56 : vector<8x128xf32>
    %58 = arith.addf %27, %55 : vector<8x128xf32>
    %59 = tpu.reciprocal %58 {approx = true} : vector<8x128xf32> -> vector<8x128xf32>
    %60 = arith.mulf %58, %59 : vector<8x128xf32>
    %cst_19 = arith.constant 2.000000e+00 : f32
    %61 = vector.broadcast %cst_19 : f32 to vector<8x128xf32>
    %62 = arith.subf %61, %60 : vector<8x128xf32>
    %63 = arith.mulf %59, %62 : vector<8x128xf32>
    %64 = arith.mulf %57, %63 : vector<8x128xf32>
    %65 = math.tanh %64 : vector<8x128xf32>
    %66 = arith.index_cast %c1_i32 : i32 to index
    %c0_20 = arith.constant 0 : index
    %c0_21 = arith.constant 0 : index
    %67 = vector.load %arg5[%66, %c0_20, %c0_21] : memref<8x8x128xf32, #tpu.memory_space<vmem>>, vector<1x8x128xf32>
    %68 = vector.shape_cast %67 : vector<1x8x128xf32> to vector<8x128xf32>
    %69 = vector.shape_cast %65 : vector<8x128xf32> to vector<1x8x128xf32>
    tpu.vector_store %arg5[%66, %c0_20, %c0_21], %69 {strides = array<i32>} : memref<8x8x128xf32, #tpu.memory_space<vmem>>, vector<1x8x128xf32>,
    %c2_i32 = arith.constant 2 : i32
    %70 = arith.index_cast %c2_i32 : i32 to index
    %c0_22 = arith.constant 0 : index
    %c0_23 = arith.constant 0 : index
    %71 = vector.load %arg2[%70, %c0_22, %c0_23] : memref<8x8x384xf32, #tpu.memory_space<vmem>>, vector<1x8x384xf32>
    %72 = vector.shape_cast %71 : vector<1x8x384xf32> to vector<8x384xf32>
    %73 = vector.extract_strided_slice %72 {offsets = [0, 0], sizes = [8, 128], strides = [1, 1]} : vector<8x384xf32> to vector<8x128xf32>
    %74 = vector.extract_strided_slice %72 {offsets = [0, 128], sizes = [8, 128], strides = [1, 1]} : vector<8x384xf32> to vector<8x128xf32>
    %75 = vector.extract_strided_slice %72 {offsets = [0, 256], sizes = [8, 128], strides = [1, 1]} : vector<8x384xf32> to vector<8x128xf32>
    %76 = arith.truncf %65 : vector<8x128xf32> to vector<8x128xbf16>
    %cst_24 = arith.constant dense<0.000000e+00> : vector<8x256xf32>
    %77 = tpu.matmul %76, %3, %cst_24 {dimension_numbers = #tpu.dot_dimension_numbers<[1], [0], [0], [1], [0, 0, 1, 1], [], []>} : vector<8x128xbf16>, vector<128x256xbf16>, vector<8x256xf32> -> vector<8x256xf32>
    %78 = vector.extract_strided_slice %77 {offsets = [0, 0], sizes = [8, 128], strides = [1, 1]} : vector<8x256xf32> to vector<8x128xf32>
    %79 = arith.addf %74, %78 : vector<8x128xf32>
    %80 = vector.extract_strided_slice %77 {offsets = [0, 128], sizes = [8, 128], strides = [1, 1]} : vector<8x256xf32> to vector<8x128xf32>
    %81 = arith.addf %75, %80 : vector<8x128xf32>
    %82 = math.tanh %79 : vector<8x128xf32>
    %83 = arith.mulf %73, %82 : vector<8x128xf32>
    %84 = arith.maximumf %81, %53 : vector<8x128xf32>
    %85 = arith.subf %84, %53 : vector<8x128xf32>
    %86 = math.exp %85 : vector<8x128xf32>
    %87 = arith.mulf %83, %86 : vector<8x128xf32>
    %88 = arith.addf %57, %87 : vector<8x128xf32>
    %89 = arith.addf %58, %86 : vector<8x128xf32>
    %90 = tpu.reciprocal %89 {approx = true} : vector<8x128xf32> -> vector<8x128xf32>
    %91 = arith.mulf %89, %90 : vector<8x128xf32>
    %cst_25 = arith.constant 2.000000e+00 : f32
    %92 = vector.broadcast %cst_25 : f32 to vector<8x128xf32>
    %93 = arith.subf %92, %91 : vector<8x128xf32>
    %94 = arith.mulf %90, %93 : vector<8x128xf32>
    %95 = arith.mulf %88, %94 : vector<8x128xf32>
    %96 = math.tanh %95 : vector<8x128xf32>
    %97 = arith.index_cast %c2_i32 : i32 to index
    %c0_26 = arith.constant 0 : index
    %c0_27 = arith.constant 0 : index
    %98 = vector.load %arg5[%97, %c0_26, %c0_27] : memref<8x8x128xf32, #tpu.memory_space<vmem>>, vector<1x8x128xf32>
    %99 = vector.shape_cast %98 : vector<1x8x128xf32> to vector<8x128xf32>
    %100 = vector.shape_cast %96 : vector<8x128xf32> to vector<1x8x128xf32>
    tpu.vector_store %arg5[%97, %c0_26, %c0_27], %100 {strides = array<i32>} : memref<8x8x128xf32, #tpu.memory_space<vmem>>, vector<1x8x128xf32>,
    %c3_i32 = arith.constant 3 : i32
    %101 = arith.index_cast %c3_i32 : i32 to index
    %c0_28 = arith.constant 0 : index
    %c0_29 = arith.constant 0 : index
    %102 = vector.load %arg2[%101, %c0_28, %c0_29] : memref<8x8x384xf32, #tpu.memory_space<vmem>>, vector<1x8x384xf32>
    %103 = vector.shape_cast %102 : vector<1x8x384xf32> to vector<8x384xf32>
    %104 = vector.extract_strided_slice %103 {offsets = [0, 0], sizes = [8, 128], strides = [1, 1]} : vector<8x384xf32> to vector<8x128xf32>
    %105 = vector.extract_strided_slice %103 {offsets = [0, 128], sizes = [8, 128], strides = [1, 1]} : vector<8x384xf32> to vector<8x128xf32>
    %106 = vector.extract_strided_slice %103 {offsets = [0, 256], sizes = [8, 128], strides = [1, 1]} : vector<8x384xf32> to vector<8x128xf32>
    %107 = arith.truncf %96 : vector<8x128xf32> to vector<8x128xbf16>
    %cst_30 = arith.constant dense<0.000000e+00> : vector<8x256xf32>
    %108 = tpu.matmul %107, %3, %cst_30 {dimension_numbers = #tpu.dot_dimension_numbers<[1], [0], [0], [1], [0, 0, 1, 1], [], []>} : vector<8x128xbf16>, vector<128x256xbf16>, vector<8x256xf32> -> vector<8x256xf32>
    %109 = vector.extract_strided_slice %108 {offsets = [0, 0], sizes = [8, 128], strides = [1, 1]} : vector<8x256xf32> to vector<8x128xf32>
    %110 = arith.addf %105, %109 : vector<8x128xf32>
    %111 = vector.extract_strided_slice %108 {offsets = [0, 128], sizes = [8, 128], strides = [1, 1]} : vector<8x256xf32> to vector<8x128xf32>
    %112 = arith.addf %106, %111 : vector<8x128xf32>
    %113 = math.tanh %110 : vector<8x128xf32>
    %114 = arith.mulf %104, %113 : vector<8x128xf32>
    %115 = arith.maximumf %112, %84 : vector<8x128xf32>
    %116 = arith.subf %115, %84 : vector<8x128xf32>
    %117 = math.exp %116 : vector<8x128xf32>
    %118 = arith.mulf %114, %117 : vector<8x128xf32>
    %119 = arith.addf %88, %118 : vector<8x128xf32>
    %120 = arith.addf %89, %117 : vector<8x128xf32>
    %121 = tpu.reciprocal %120 {approx = true} : vector<8x128xf32> -> vector<8x128xf32>
    %122 = arith.mulf %120, %121 : vector<8x128xf32>
    %cst_31 = arith.constant 2.000000e+00 : f32
    %123 = vector.broadcast %cst_31 : f32 to vector<8x128xf32>
    %124 = arith.subf %123, %122 : vector<8x128xf32>
    %125 = arith.mulf %121, %124 : vector<8x128xf32>
    %126 = arith.mulf %119, %125 : vector<8x128xf32>
    %127 = math.tanh %126 : vector<8x128xf32>
    %128 = arith.index_cast %c3_i32 : i32 to index
    %c0_32 = arith.constant 0 : index
    %c0_33 = arith.constant 0 : index
    %129 = vector.load %arg5[%128, %c0_32, %c0_33] : memref<8x8x128xf32, #tpu.memory_space<vmem>>, vector<1x8x128xf32>
    %130 = vector.shape_cast %129 : vector<1x8x128xf32> to vector<8x128xf32>
    %131 = vector.shape_cast %127 : vector<8x128xf32> to vector<1x8x128xf32>
    tpu.vector_store %arg5[%128, %c0_32, %c0_33], %131 {strides = array<i32>} : memref<8x8x128xf32, #tpu.memory_space<vmem>>, vector<1x8x128xf32>,
    %c4_i32 = arith.constant 4 : i32
    %132 = arith.index_cast %c4_i32 : i32 to index
    %c0_34 = arith.constant 0 : index
    %c0_35 = arith.constant 0 : index
    %133 = vector.load %arg2[%132, %c0_34, %c0_35] : memref<8x8x384xf32, #tpu.memory_space<vmem>>, vector<1x8x384xf32>
    %134 = vector.shape_cast %133 : vector<1x8x384xf32> to vector<8x384xf32>
    %135 = vector.extract_strided_slice %134 {offsets = [0, 0], sizes = [8, 128], strides = [1, 1]} : vector<8x384xf32> to vector<8x128xf32>
    %136 = vector.extract_strided_slice %134 {offsets = [0, 128], sizes = [8, 128], strides = [1, 1]} : vector<8x384xf32> to vector<8x128xf32>
    %137 = vector.extract_strided_slice %134 {offsets = [0, 256], sizes = [8, 128], strides = [1, 1]} : vector<8x384xf32> to vector<8x128xf32>
    %138 = arith.truncf %127 : vector<8x128xf32> to vector<8x128xbf16>
    %cst_36 = arith.constant dense<0.000000e+00> : vector<8x256xf32>
    %139 = tpu.matmul %138, %3, %cst_36 {dimension_numbers = #tpu.dot_dimension_numbers<[1], [0], [0], [1], [0, 0, 1, 1], [], []>} : vector<8x128xbf16>, vector<128x256xbf16>, vector<8x256xf32> -> vector<8x256xf32>
    %140 = vector.extract_strided_slice %139 {offsets = [0, 0], sizes = [8, 128], strides = [1, 1]} : vector<8x256xf32> to vector<8x128xf32>
    %141 = arith.addf %136, %140 : vector<8x128xf32>
    %142 = vector.extract_strided_slice %139 {offsets = [0, 128], sizes = [8, 128], strides = [1, 1]} : vector<8x256xf32> to vector<8x128xf32>
    %143 = arith.addf %137, %142 : vector<8x128xf32>
    %144 = math.tanh %141 : vector<8x128xf32>
    %145 = arith.mulf %135, %144 : vector<8x128xf32>
    %146 = arith.maximumf %143, %115 : vector<8x128xf32>
    %147 = arith.subf %146, %115 : vector<8x128xf32>
    %148 = math.exp %147 : vector<8x128xf32>
    %149 = arith.mulf %145, %148 : vector<8x128xf32>
    %150 = arith.addf %119, %149 : vector<8x128xf32>
    %151 = arith.addf %120, %148 : vector<8x128xf32>
    %152 = tpu.reciprocal %151 {approx = true} : vector<8x128xf32> -> vector<8x128xf32>
    %153 = arith.mulf %151, %152 : vector<8x128xf32>
    %cst_37 = arith.constant 2.000000e+00 : f32
    %154 = vector.broadcast %cst_37 : f32 to vector<8x128xf32>
    %155 = arith.subf %154, %153 : vector<8x128xf32>
    %156 = arith.mulf %152, %155 : vector<8x128xf32>
    %157 = arith.mulf %150, %156 : vector<8x128xf32>
    %158 = math.tanh %157 : vector<8x128xf32>
    %159 = arith.index_cast %c4_i32 : i32 to index
    %c0_38 = arith.constant 0 : index
    %c0_39 = arith.constant 0 : index
    %160 = vector.load %arg5[%159, %c0_38, %c0_39] : memref<8x8x128xf32, #tpu.memory_space<vmem>>, vector<1x8x128xf32>
    %161 = vector.shape_cast %160 : vector<1x8x128xf32> to vector<8x128xf32>
    %162 = vector.shape_cast %158 : vector<8x128xf32> to vector<1x8x128xf32>
    tpu.vector_store %arg5[%159, %c0_38, %c0_39], %162 {strides = array<i32>} : memref<8x8x128xf32, #tpu.memory_space<vmem>>, vector<1x8x128xf32>,
    %c5_i32 = arith.constant 5 : i32
    %163 = arith.index_cast %c5_i32 : i32 to index
    %c0_40 = arith.constant 0 : index
    %c0_41 = arith.constant 0 : index
    %164 = vector.load %arg2[%163, %c0_40, %c0_41] : memref<8x8x384xf32, #tpu.memory_space<vmem>>, vector<1x8x384xf32>
    %165 = vector.shape_cast %164 : vector<1x8x384xf32> to vector<8x384xf32>
    %166 = vector.extract_strided_slice %165 {offsets = [0, 0], sizes = [8, 128], strides = [1, 1]} : vector<8x384xf32> to vector<8x128xf32>
    %167 = vector.extract_strided_slice %165 {offsets = [0, 128], sizes = [8, 128], strides = [1, 1]} : vector<8x384xf32> to vector<8x128xf32>
    %168 = vector.extract_strided_slice %165 {offsets = [0, 256], sizes = [8, 128], strides = [1, 1]} : vector<8x384xf32> to vector<8x128xf32>
    %169 = arith.truncf %158 : vector<8x128xf32> to vector<8x128xbf16>
    %cst_42 = arith.constant dense<0.000000e+00> : vector<8x256xf32>
    %170 = tpu.matmul %169, %3, %cst_42 {dimension_numbers = #tpu.dot_dimension_numbers<[1], [0], [0], [1], [0, 0, 1, 1], [], []>} : vector<8x128xbf16>, vector<128x256xbf16>, vector<8x256xf32> -> vector<8x256xf32>
    %171 = vector.extract_strided_slice %170 {offsets = [0, 0], sizes = [8, 128], strides = [1, 1]} : vector<8x256xf32> to vector<8x128xf32>
    %172 = arith.addf %167, %171 : vector<8x128xf32>
    %173 = vector.extract_strided_slice %170 {offsets = [0, 128], sizes = [8, 128], strides = [1, 1]} : vector<8x256xf32> to vector<8x128xf32>
    %174 = arith.addf %168, %173 : vector<8x128xf32>
    %175 = math.tanh %172 : vector<8x128xf32>
    %176 = arith.mulf %166, %175 : vector<8x128xf32>
    %177 = arith.maximumf %174, %146 : vector<8x128xf32>
    %178 = arith.subf %177, %146 : vector<8x128xf32>
    %179 = math.exp %178 : vector<8x128xf32>
    %180 = arith.mulf %176, %179 : vector<8x128xf32>
    %181 = arith.addf %150, %180 : vector<8x128xf32>
    %182 = arith.addf %151, %179 : vector<8x128xf32>
    %183 = tpu.reciprocal %182 {approx = true} : vector<8x128xf32> -> vector<8x128xf32>
    %184 = arith.mulf %182, %183 : vector<8x128xf32>
    %cst_43 = arith.constant 2.000000e+00 : f32
    %185 = vector.broadcast %cst_43 : f32 to vector<8x128xf32>
    %186 = arith.subf %185, %184 : vector<8x128xf32>
    %187 = arith.mulf %183, %186 : vector<8x128xf32>
    %188 = arith.mulf %181, %187 : vector<8x128xf32>
    %189 = math.tanh %188 : vector<8x128xf32>
    %190 = arith.index_cast %c5_i32 : i32 to index
    %c0_44 = arith.constant 0 : index
    %c0_45 = arith.constant 0 : index
    %191 = vector.load %arg5[%190, %c0_44, %c0_45] : memref<8x8x128xf32, #tpu.memory_space<vmem>>, vector<1x8x128xf32>
    %192 = vector.shape_cast %191 : vector<1x8x128xf32> to vector<8x128xf32>
    %193 = vector.shape_cast %189 : vector<8x128xf32> to vector<1x8x128xf32>
    tpu.vector_store %arg5[%190, %c0_44, %c0_45], %193 {strides = array<i32>} : memref<8x8x128xf32, #tpu.memory_space<vmem>>, vector<1x8x128xf32>,
    %c6_i32 = arith.constant 6 : i32
    %194 = arith.index_cast %c6_i32 : i32 to index
    %c0_46 = arith.constant 0 : index
    %c0_47 = arith.constant 0 : index
    %195 = vector.load %arg2[%194, %c0_46, %c0_47] : memref<8x8x384xf32, #tpu.memory_space<vmem>>, vector<1x8x384xf32>
    %196 = vector.shape_cast %195 : vector<1x8x384xf32> to vector<8x384xf32>
    %197 = vector.extract_strided_slice %196 {offsets = [0, 0], sizes = [8, 128], strides = [1, 1]} : vector<8x384xf32> to vector<8x128xf32>
    %198 = vector.extract_strided_slice %196 {offsets = [0, 128], sizes = [8, 128], strides = [1, 1]} : vector<8x384xf32> to vector<8x128xf32>
    %199 = vector.extract_strided_slice %196 {offsets = [0, 256], sizes = [8, 128], strides = [1, 1]} : vector<8x384xf32> to vector<8x128xf32>
    %200 = arith.truncf %189 : vector<8x128xf32> to vector<8x128xbf16>
    %cst_48 = arith.constant dense<0.000000e+00> : vector<8x256xf32>
    %201 = tpu.matmul %200, %3, %cst_48 {dimension_numbers = #tpu.dot_dimension_numbers<[1], [0], [0], [1], [0, 0, 1, 1], [], []>} : vector<8x128xbf16>, vector<128x256xbf16>, vector<8x256xf32> -> vector<8x256xf32>
    %202 = vector.extract_strided_slice %201 {offsets = [0, 0], sizes = [8, 128], strides = [1, 1]} : vector<8x256xf32> to vector<8x128xf32>
    %203 = arith.addf %198, %202 : vector<8x128xf32>
    %204 = vector.extract_strided_slice %201 {offsets = [0, 128], sizes = [8, 128], strides = [1, 1]} : vector<8x256xf32> to vector<8x128xf32>
    %205 = arith.addf %199, %204 : vector<8x128xf32>
    %206 = math.tanh %203 : vector<8x128xf32>
    %207 = arith.mulf %197, %206 : vector<8x128xf32>
    %208 = arith.maximumf %205, %177 : vector<8x128xf32>
    %209 = arith.subf %208, %177 : vector<8x128xf32>
    %210 = math.exp %209 : vector<8x128xf32>
    %211 = arith.mulf %207, %210 : vector<8x128xf32>
    %212 = arith.addf %181, %211 : vector<8x128xf32>
    %213 = arith.addf %182, %210 : vector<8x128xf32>
    %214 = tpu.reciprocal %213 {approx = true} : vector<8x128xf32> -> vector<8x128xf32>
    %215 = arith.mulf %213, %214 : vector<8x128xf32>
    %cst_49 = arith.constant 2.000000e+00 : f32
    %216 = vector.broadcast %cst_49 : f32 to vector<8x128xf32>
    %217 = arith.subf %216, %215 : vector<8x128xf32>
    %218 = arith.mulf %214, %217 : vector<8x128xf32>
    %219 = arith.mulf %212, %218 : vector<8x128xf32>
    %220 = math.tanh %219 : vector<8x128xf32>
    %221 = arith.index_cast %c6_i32 : i32 to index
    %c0_50 = arith.constant 0 : index
    %c0_51 = arith.constant 0 : index
    %222 = vector.load %arg5[%221, %c0_50, %c0_51] : memref<8x8x128xf32, #tpu.memory_space<vmem>>, vector<1x8x128xf32>
    %223 = vector.shape_cast %222 : vector<1x8x128xf32> to vector<8x128xf32>
    %224 = vector.shape_cast %220 : vector<8x128xf32> to vector<1x8x128xf32>
    tpu.vector_store %arg5[%221, %c0_50, %c0_51], %224 {strides = array<i32>} : memref<8x8x128xf32, #tpu.memory_space<vmem>>, vector<1x8x128xf32>,
    %c7_i32 = arith.constant 7 : i32
    %225 = arith.index_cast %c7_i32 : i32 to index
    %c0_52 = arith.constant 0 : index
    %c0_53 = arith.constant 0 : index
    %226 = vector.load %arg2[%225, %c0_52, %c0_53] : memref<8x8x384xf32, #tpu.memory_space<vmem>>, vector<1x8x384xf32>
    %227 = vector.shape_cast %226 : vector<1x8x384xf32> to vector<8x384xf32>
    %228 = vector.extract_strided_slice %227 {offsets = [0, 0], sizes = [8, 128], strides = [1, 1]} : vector<8x384xf32> to vector<8x128xf32>
    %229 = vector.extract_strided_slice %227 {offsets = [0, 128], sizes = [8, 128], strides = [1, 1]} : vector<8x384xf32> to vector<8x128xf32>
    %230 = vector.extract_strided_slice %227 {offsets = [0, 256], sizes = [8, 128], strides = [1, 1]} : vector<8x384xf32> to vector<8x128xf32>
    %231 = arith.truncf %220 : vector<8x128xf32> to vector<8x128xbf16>
    %cst_54 = arith.constant dense<0.000000e+00> : vector<8x256xf32>
    %232 = tpu.matmul %231, %3, %cst_54 {dimension_numbers = #tpu.dot_dimension_numbers<[1], [0], [0], [1], [0, 0, 1, 1], [], []>} : vector<8x128xbf16>, vector<128x256xbf16>, vector<8x256xf32> -> vector<8x256xf32>
    %233 = vector.extract_strided_slice %232 {offsets = [0, 0], sizes = [8, 128], strides = [1, 1]} : vector<8x256xf32> to vector<8x128xf32>
    %234 = arith.addf %229, %233 : vector<8x128xf32>
    %235 = vector.extract_strided_slice %232 {offsets = [0, 128], sizes = [8, 128], strides = [1, 1]} : vector<8x256xf32> to vector<8x128xf32>
    %236 = arith.addf %230, %235 : vector<8x128xf32>
    %237 = math.tanh %234 : vector<8x128xf32>
    %238 = arith.mulf %228, %237 : vector<8x128xf32>
    %239 = arith.maximumf %236, %208 : vector<8x128xf32>
    %240 = arith.subf %239, %208 : vector<8x128xf32>
    %241 = math.exp %240 : vector<8x128xf32>
    %242 = arith.mulf %238, %241 : vector<8x128xf32>
    %243 = arith.addf %212, %242 : vector<8x128xf32>
    %244 = arith.addf %213, %241 : vector<8x128xf32>
    %245 = tpu.reciprocal %244 {approx = true} : vector<8x128xf32> -> vector<8x128xf32>
    %246 = arith.mulf %244, %245 : vector<8x128xf32>
    %cst_55 = arith.constant 2.000000e+00 : f32
    %247 = vector.broadcast %cst_55 : f32 to vector<8x128xf32>
    %248 = arith.subf %247, %246 : vector<8x128xf32>
    %249 = arith.mulf %245, %248 : vector<8x128xf32>
    %250 = arith.mulf %243, %249 : vector<8x128xf32>
    %251 = math.tanh %250 : vector<8x128xf32>
    %252 = arith.index_cast %c7_i32 : i32 to index
    %c0_56 = arith.constant 0 : index
    %c0_57 = arith.constant 0 : index
    %253 = vector.load %arg5[%252, %c0_56, %c0_57] : memref<8x8x128xf32, #tpu.memory_space<vmem>>, vector<1x8x128xf32>
    %254 = vector.shape_cast %253 : vector<1x8x128xf32> to vector<8x128xf32>
    %255 = vector.shape_cast %251 : vector<8x128xf32> to vector<1x8x128xf32>
    tpu.vector_store %arg5[%252, %c0_56, %c0_57], %255 {strides = array<i32>} : memref<8x8x128xf32, #tpu.memory_space<vmem>>, vector<1x8x128xf32>,
    %c8_i32 = arith.constant 8 : i32
    %c0_58 = arith.constant 0 : index
    %c0_59 = arith.constant 0 : index
    %256 = vector.load %arg6[%c0_58, %c0_59] : memref<8x128xf32, #tpu.memory_space<vmem>>, vector<8x128xf32>
    tpu.vector_store %arg6[%c0_58, %c0_59], %243 {strides = array<i32>} : memref<8x128xf32, #tpu.memory_space<vmem>>, vector<8x128xf32>,
    %c0_60 = arith.constant 0 : index
    %c0_61 = arith.constant 0 : index
    %257 = vector.load %arg7[%c0_60, %c0_61] : memref<8x128xf32, #tpu.memory_space<vmem>>, vector<8x128xf32>
    tpu.vector_store %arg7[%c0_60, %c0_61], %244 {strides = array<i32>} : memref<8x128xf32, #tpu.memory_space<vmem>>, vector<8x128xf32>,
    %c0_62 = arith.constant 0 : index
    %c0_63 = arith.constant 0 : index
    %258 = vector.load %arg8[%c0_62, %c0_63] : memref<8x128xf32, #tpu.memory_space<vmem>>, vector<8x128xf32>
    tpu.vector_store %arg8[%c0_62, %c0_63], %251 {strides = array<i32>} : memref<8x128xf32, #tpu.memory_space<vmem>>, vector<8x128xf32>,
    %c0_64 = arith.constant 0 : index
    %c0_65 = arith.constant 0 : index
    %259 = vector.load %arg9[%c0_64, %c0_65] : memref<8x128xf32, #tpu.memory_space<vmem>>, vector<8x128xf32>
    tpu.vector_store %arg9[%c0_64, %c0_65], %239 {strides = array<i32>} : memref<8x128xf32, #tpu.memory_space<vmem>>, vector<8x128xf32>,
    return
  }
  func.func @transform_0(%arg0: i32, %arg1: i32) -> (i32, i32, i32) {
    %c0_i32 = arith.constant 0 : i32
    %c0_i32_0 = arith.constant 0 : i32
    return %arg1, %arg0, %c0_i32 : i32, i32, i32
  }
  func.func @transform_1(%arg0: i32, %arg1: i32) -> (i32, i32) {
    %c0_i32 = arith.constant 0 : i32
    %c0_i32_0 = arith.constant 0 : i32
    %c0_i32_1 = arith.constant 0 : i32
    return %c0_i32, %c0_i32_0 : i32, i32
  }
  func.func @transform_2(%arg0: i32, %arg1: i32) -> (i32, i32) {
    %c0_i32 = arith.constant 0 : i32
    %c0_i32_0 = arith.constant 0 : i32
    %c0_i32_1 = arith.constant 0 : i32
    return %c0_i32, %c0_i32_0 : i32, i32
  }
  func.func @transform_3(%arg0: i32, %arg1: i32) -> (i32, i32, i32) {
    %c0_i32 = arith.constant 0 : i32
    %c0_i32_0 = arith.constant 0 : i32
    return %arg1, %arg0, %c0_i32 : i32, i32, i32
  }
}

module attributes {stable_mosaic.version = 11 : i64} {
  func.func @_rwa_kernel(%arg0: i32, %arg1: i32, %arg2: memref<8x8x384xf32, #tpu.memory_space<vmem>>, %arg3: memref<128x256xbf16, #tpu.memory_space<vmem>>, %arg4: memref<1x128xf32, #tpu.memory_space<vmem>>, %arg5: memref<8x8x128xf32, #tpu.memory_space<vmem>>, %arg6: memref<8x128xf32, #tpu.memory_space<vmem>>, %arg7: memref<8x128xf32, #tpu.memory_space<vmem>>, %arg8: memref<8x128xf32, #tpu.memory_space<vmem>>, %arg9: memref<8x128xf32, #tpu.memory_space<vmem>>) attributes {dimension_semantics = [#tpu.dimension_semantics<parallel>, #tpu.dimension_semantics<arbitrary>], iteration_bounds = array<i64: 1, 1>, scalar_prefetch = 0 : i64, scratch_operands = 4 : i64, tpu.core_type = #tpu.core_type<tc>, window_params = [{transform_indices = @transform_0, window_bounds = array<i64: 8, 8, 384>}, {pipeline_mode = #tpu.pipeline_mode<synchronous>, transform_indices = @transform_1, window_bounds = array<i64: 128, 256>}, {pipeline_mode = #tpu.pipeline_mode<synchronous>, transform_indices = @transform_2, window_bounds = array<i64: 1, 128>}, {transform_indices = @transform_3, window_bounds = array<i64: 8, 8, 128>}]} {
    %c0_i32 = arith.constant 0 : i32
    %0 = arith.cmpi eq, %arg1, %c0_i32 : i32
    %1 = arith.extui %0 : i1 to i32
    %c0_i32_0 = arith.constant 0 : i32
    %2 = arith.cmpi ne, %1, %c0_i32_0 : i32
    scf.if %2 {
      %c0_66 = arith.constant 0 : index
      %c0_67 = arith.constant 0 : index
      %260 = vector.load %arg4[%c0_66, %c0_67] : memref<1x128xf32, #tpu.memory_space<vmem>>, vector<1x128xf32>
      %261 = vector.shape_cast %260 : vector<1x128xf32> to vector<1x128xf32>
      %262 = vector.broadcast %261 : vector<1x128xf32> to vector<8x128xf32>
      %263 = math.tanh %262 : vector<8x128xf32>
      %c0_68 = arith.constant 0 : index
      %c0_69 = arith.constant 0 : index
      %264 = vector.load %arg8[%c0_68, %c0_69] : memref<8x128xf32, #tpu.memory_space<vmem>>, vector<8x128xf32>
      tpu.vector_store %arg8[%c0_68, %c0_69], %263 {strides = array<i32>} : memref<8x128xf32, #tpu.memory_space<vmem>>, vector<8x128xf32>,
      %cst_70 = arith.constant 0.000000e+00 : f32
      %265 = vector.broadcast %cst_70 : f32 to vector<8x128xf32>
      %c0_71 = arith.constant 0 : index
      %c0_72 = arith.constant 0 : index
      %266 = vector.load %arg6[%c0_71, %c0_72] : memref<8x128xf32, #tpu.memory_space<vmem>>, vector<8x128xf32>
      tpu.vector_store %arg6[%c0_71, %c0_72], %265 {strides = array<i32>} : memref<8x128xf32, #tpu.memory_space<vmem>>, vector<8x128xf32>,
      %cst_73 = arith.constant 0.000000e+00 : f32
      %267 = vector.broadcast %cst_73 : f32 to vector<8x128xf32>
      %c0_74 = arith.constant 0 : index
      %c0_75 = arith.constant 0 : index
      %268 = vector.load %arg7[%c0_74, %c0_75] : memref<8x128xf32, #tpu.memory_space<vmem>>, vector<8x128xf32>
      tpu.vector_store %arg7[%c0_74, %c0_75], %267 {strides = array<i32>} : memref<8x128xf32, #tpu.memory_space<vmem>>, vector<8x128xf32>,
      %cst_76 = arith.constant 9.99999935E-39 : f32
      %269 = vector.broadcast %cst_76 : f32 to vector<8x128xf32>
      %c0_77 = arith.constant 0 : index
      %c0_78 = arith.constant 0 : index
      %270 = vector.load %arg9[%c0_77, %c0_78] : memref<8x128xf32, #tpu.memory_space<vmem>>, vector<8x128xf32>
      tpu.vector_store %arg9[%c0_77, %c0_78], %269 {strides = array<i32>} : memref<8x128xf32, #tpu.memory_space<vmem>>, vector<8x128xf32>,
    } else {
    }
    %c0 = arith.constant 0 : index
    %c0_1 = arith.constant 0 : index
    %3 = vector.load %arg3[%c0, %c0_1] : memref<128x256xbf16, #tpu.memory_space<vmem>>, vector<128x256xbf16>
    %c0_2 = arith.constant 0 : index
    %c0_3 = arith.constant 0 : index
    %4 = vector.load %arg6[%c0_2, %c0_3] : memref<8x128xf32, #tpu.memory_space<vmem>>, vector<8x128xf32>
    %c0_4 = arith.constant 0 : index
    %c0_5 = arith.constant 0 : index
    %5 = vector.load %arg7[%c0_4, %c0_5] : memref<8x128xf32, #tpu.memory_space<vmem>>, vector<8x128xf32>
    %c0_6 = arith.constant 0 : index
    %c0_7 = arith.constant 0 : index
    %6 = vector.load %arg8[%c0_6, %c0_7] : memref<8x128xf32, #tpu.memory_space<vmem>>, vector<8x128xf32>
    %c0_8 = arith.constant 0 : index
    %c0_9 = arith.constant 0 : index
    %7 = vector.load %arg9[%c0_8, %c0_9] : memref<8x128xf32, #tpu.memory_space<vmem>>, vector<8x128xf32>
    %c0_i32_10 = arith.constant 0 : i32
    %8 = arith.index_cast %c0_i32_10 : i32 to index
    %c0_11 = arith.constant 0 : index
    %c0_12 = arith.constant 0 : index
    %9 = vector.load %arg2[%8, %c0_11, %c0_12] : memref<8x8x384xf32, #tpu.memory_space<vmem>>, vector<1x8x384xf32>
    %10 = vector.shape_cast %9 : vector<1x8x384xf32> to vector<8x384xf32>
    %11 = vector.extract_strided_slice %10 {offsets = [0, 0], sizes = [8, 128], strides = [1, 1]} : vector<8x384xf32> to vector<8x128xf32>
    %12 = vector.extract_strided_slice %10 {offsets = [0, 128], sizes = [8, 128], strides = [1, 1]} : vector<8x384xf32> to vector<8x128xf32>
    %13 = vector.extract_strided_slice %10 {offsets = [0, 256], sizes = [8, 128], strides = [1, 1]} : vector<8x384xf32> to vector<8x128xf32>
    %14 = arith.truncf %6 : vector<8x128xf32> to vector<8x128xbf16>
    %cst = arith.constant dense<0.000000e+00> : vector<8x256xf32>
    %15 = tpu.matmul %14, %3, %cst {dimension_numbers = #tpu.dot_dimension_numbers<[1], [0], [0], [1], [0, 0, 1, 1], [], []>} : vector<8x128xbf16>, vector<128x256xbf16>, vector<8x256xf32> -> vector<8x256xf32>
    %16 = vector.extract_strided_slice %15 {offsets = [0, 0], sizes = [8, 128], strides = [1, 1]} : vector<8x256xf32> to vector<8x128xf32>
    %17 = arith.addf %12, %16 : vector<8x128xf32>
    %18 = vector.extract_strided_slice %15 {offsets = [0, 128], sizes = [8, 128], strides = [1, 1]} : vector<8x256xf32> to vector<8x128xf32>
    %19 = arith.addf %13, %18 : vector<8x128xf32>
    %20 = math.tanh %17 : vector<8x128xf32>
    %21 = arith.mulf %11, %20 : vector<8x128xf32>
    %22 = arith.maximumf %19, %7 : vector<8x128xf32>
    %23 = arith.subf %22, %7 : vector<8x128xf32>
    %24 = math.exp %23 : vector<8x128xf32>
    %25 = arith.mulf %21, %24 : vector<8x128xf32>
    %26 = arith.addf %4, %25 : vector<8x128xf32>
    %27 = arith.addf %5, %24 : vector<8x128xf32>
    %28 = tpu.reciprocal %27 {approx = true} : vector<8x128xf32> -> vector<8x128xf32>
    %29 = arith.mulf %27, %28 : vector<8x128xf32>
    %cst_13 = arith.constant 2.000000e+00 : f32
    %30 = vector.broadcast %cst_13 : f32 to vector<8x128xf32>
    %31 = arith.subf %30, %29 : vector<8x128xf32>
    %32 = arith.mulf %28, %31 : vector<8x128xf32>
    %33 = arith.mulf %26, %32 : vector<8x128xf32>
    %34 = math.tanh %33 : vector<8x128xf32>
    %35 = arith.index_cast %c0_i32_10 : i32 to index
    %c0_14 = arith.constant 0 : index
    %c0_15 = arith.constant 0 : index
    %36 = vector.load %arg5[%35, %c0_14, %c0_15] : memref<8x8x128xf32, #tpu.memory_space<vmem>>, vector<1x8x128xf32>
    %37 = vector.shape_cast %36 : vector<1x8x128xf32> to vector<8x128xf32>
    %38 = vector.shape_cast %34 : vector<8x128xf32> to vector<1x8x128xf32>
    tpu.vector_store %arg5[%35, %c0_14, %c0_15], %38 {strides = array<i32>} : memref<8x8x128xf32, #tpu.memory_space<vmem>>, vector<1x8x128xf32>,
    %c1_i32 = arith.constant 1 : i32
    %39 = arith.index_cast %c1_i32 : i32 to index
    %c0_16 = arith.constant 0 : index
    %c0_17 = arith.constant 0 : index
    %40 = vector.load %arg2[%39, %c0_16, %c0_17] : memref<8x8x384xf32, #tpu.memory_space<vmem>>, vector<1x8x384xf32>
    %41 = vector.shape_cast %40 : vector<1x8x384xf32> to vector<8x384xf32>
    %42 = vector.extract_strided_slice %41 {offsets = [0, 0], sizes = [8, 128], strides = [1, 1]} : vector<8x384xf32> to vector<8x128xf32>
    %43 = vector.extract_strided_slice %41 {offsets = [0, 128], sizes = [8, 128], strides = [1, 1]} : vector<8x384xf32> to vector<8x128xf32>
    %44 = vector.extract_strided_slice %41 {offsets = [0, 256], sizes = [8, 128], strides = [1, 1]} : vector<8x384xf32> to vector<8x128xf32>
    %45 = arith.truncf %34 : vector<8x128xf32> to vector<8x128xbf16>
    %cst_18 = arith.constant dense<0.000000e+00> : vector<8x256xf32>
    %46 = tpu.matmul %45, %3, %cst_18 {dimension_numbers = #tpu.dot_dimension_numbers<[1], [0], [0], [1], [0, 0, 1, 1], [], []>} : vector<8x128xbf16>, vector<128x256xbf16>, vector<8x256xf32> -> vector<8x256xf32>
    %47 = vector.extract_strided_slice %46 {offsets = [0, 0], sizes = [8, 128], strides = [1, 1]} : vector<8x256xf32> to vector<8x128xf32>
    %48 = arith.addf %43, %47 : vector<8x128xf32>
    %49 = vector.extract_strided_slice %46 {offsets = [0, 128], sizes = [8, 128], strides = [1, 1]} : vector<8x256xf32> to vector<8x128xf32>
    %50 = arith.addf %44, %49 : vector<8x128xf32>
    %51 = math.tanh %48 : vector<8x128xf32>
    %52 = arith.mulf %42, %51 : vector<8x128xf32>
    %53 = arith.maximumf %50, %22 : vector<8x128xf32>
    %54 = arith.subf %53, %22 : vector<8x128xf32>
    %55 = math.exp %54 : vector<8x128xf32>
    %56 = arith.mulf %52, %55 : vector<8x128xf32>
    %57 = arith.addf %26, %56 : vector<8x128xf32>
    %58 = arith.addf %27, %55 : vector<8x128xf32>
    %59 = tpu.reciprocal %58 {approx = true} : vector<8x128xf32> -> vector<8x128xf32>
    %60 = arith.mulf %58, %59 : vector<8x128xf32>
    %cst_19 = arith.constant 2.000000e+00 : f32
    %61 = vector.broadcast %cst_19 : f32 to vector<8x128xf32>
    %62 = arith.subf %61, %60 : vector<8x128xf32>
    %63 = arith.mulf %59, %62 : vector<8x128xf32>
    %64 = arith.mulf %57, %63 : vector<8x128xf32>
    %65 = math.tanh %64 : vector<8x128xf32>
    %66 = arith.index_cast %c1_i32 : i32 to index
    %c0_20 = arith.constant 0 : index
    %c0_21 = arith.constant 0 : index
    %67 = vector.load %arg5[%66, %c0_20, %c0_21] : memref<8x8x128xf32, #tpu.memory_space<vmem>>, vector<1x8x128xf32>
    %68 = vector.shape_cast %67 : vector<1x8x128xf32> to vector<8x128xf32>
    %69 = vector.shape_cast %65 : vector<8x128xf32> to vector<1x8x128xf32>
    tpu.vector_store %arg5[%66, %c0_20, %c0_21], %69 {strides = array<i32>} : memref<8x8x128xf32, #tpu.memory_space<vmem>>, vector<1x8x128xf32>,
    %c2_i32 = arith.constant 2 : i32
    %70 = arith.index_cast %c2_i32 : i32 to index
    %c0_22 = arith.constant 0 : index
    %c0_23 = arith.constant 0 : index
    %71 = vector.load %arg2[%70, %c0_22, %c0_23] : memref<8x8x384xf32, #tpu.memory_space<vmem>>, vector<1x8x384xf32>
    %72 = vector.shape_cast %71 : vector<1x8x384xf32> to vector<8x384xf32>
    %73 = vector.extract_strided_slice %72 {offsets = [0, 0], sizes = [8, 128], strides = [1, 1]} : vector<8x384xf32> to vector<8x128xf32>
    %74 = vector.extract_strided_slice %72 {offsets = [0, 128], sizes = [8, 128], strides = [1, 1]} : vector<8x384xf32> to vector<8x128xf32>
    %75 = vector.extract_strided_slice %72 {offsets = [0, 256], sizes = [8, 128], strides = [1, 1]} : vector<8x384xf32> to vector<8x128xf32>
    %76 = arith.truncf %65 : vector<8x128xf32> to vector<8x128xbf16>
    %cst_24 = arith.constant dense<0.000000e+00> : vector<8x256xf32>
    %77 = tpu.matmul %76, %3, %cst_24 {dimension_numbers = #tpu.dot_dimension_numbers<[1], [0], [0], [1], [0, 0, 1, 1], [], []>} : vector<8x128xbf16>, vector<128x256xbf16>, vector<8x256xf32> -> vector<8x256xf32>
    %78 = vector.extract_strided_slice %77 {offsets = [0, 0], sizes = [8, 128], strides = [1, 1]} : vector<8x256xf32> to vector<8x128xf32>
    %79 = arith.addf %74, %78 : vector<8x128xf32>
    %80 = vector.extract_strided_slice %77 {offsets = [0, 128], sizes = [8, 128], strides = [1, 1]} : vector<8x256xf32> to vector<8x128xf32>
    %81 = arith.addf %75, %80 : vector<8x128xf32>
    %82 = math.tanh %79 : vector<8x128xf32>
    %83 = arith.mulf %73, %82 : vector<8x128xf32>
    %84 = arith.maximumf %81, %53 : vector<8x128xf32>
    %85 = arith.subf %84, %53 : vector<8x128xf32>
    %86 = math.exp %85 : vector<8x128xf32>
    %87 = arith.mulf %83, %86 : vector<8x128xf32>
    %88 = arith.addf %57, %87 : vector<8x128xf32>
    %89 = arith.addf %58, %86 : vector<8x128xf32>
    %90 = tpu.reciprocal %89 {approx = true} : vector<8x128xf32> -> vector<8x128xf32>
    %91 = arith.mulf %89, %90 : vector<8x128xf32>
    %cst_25 = arith.constant 2.000000e+00 : f32
    %92 = vector.broadcast %cst_25 : f32 to vector<8x128xf32>
    %93 = arith.subf %92, %91 : vector<8x128xf32>
    %94 = arith.mulf %90, %93 : vector<8x128xf32>
    %95 = arith.mulf %88, %94 : vector<8x128xf32>
    %96 = math.tanh %95 : vector<8x128xf32>
    %97 = arith.index_cast %c2_i32 : i32 to index
    %c0_26 = arith.constant 0 : index
    %c0_27 = arith.constant 0 : index
    %98 = vector.load %arg5[%97, %c0_26, %c0_27] : memref<8x8x128xf32, #tpu.memory_space<vmem>>, vector<1x8x128xf32>
    %99 = vector.shape_cast %98 : vector<1x8x128xf32> to vector<8x128xf32>
    %100 = vector.shape_cast %96 : vector<8x128xf32> to vector<1x8x128xf32>
    tpu.vector_store %arg5[%97, %c0_26, %c0_27], %100 {strides = array<i32>} : memref<8x8x128xf32, #tpu.memory_space<vmem>>, vector<1x8x128xf32>,
    %c3_i32 = arith.constant 3 : i32
    %101 = arith.index_cast %c3_i32 : i32 to index
    %c0_28 = arith.constant 0 : index
    %c0_29 = arith.constant 0 : index
    %102 = vector.load %arg2[%101, %c0_28, %c0_29] : memref<8x8x384xf32, #tpu.memory_space<vmem>>, vector<1x8x384xf32>
    %103 = vector.shape_cast %102 : vector<1x8x384xf32> to vector<8x384xf32>
    %104 = vector.extract_strided_slice %103 {offsets = [0, 0], sizes = [8, 128], strides = [1, 1]} : vector<8x384xf32> to vector<8x128xf32>
    %105 = vector.extract_strided_slice %103 {offsets = [0, 128], sizes = [8, 128], strides = [1, 1]} : vector<8x384xf32> to vector<8x128xf32>
    %106 = vector.extract_strided_slice %103 {offsets = [0, 256], sizes = [8, 128], strides = [1, 1]} : vector<8x384xf32> to vector<8x128xf32>
    %107 = arith.truncf %96 : vector<8x128xf32> to vector<8x128xbf16>
    %cst_30 = arith.constant dense<0.000000e+00> : vector<8x256xf32>
    %108 = tpu.matmul %107, %3, %cst_30 {dimension_numbers = #tpu.dot_dimension_numbers<[1], [0], [0], [1], [0, 0, 1, 1], [], []>} : vector<8x128xbf16>, vector<128x256xbf16>, vector<8x256xf32> -> vector<8x256xf32>
    %109 = vector.extract_strided_slice %108 {offsets = [0, 0], sizes = [8, 128], strides = [1, 1]} : vector<8x256xf32> to vector<8x128xf32>
    %110 = arith.addf %105, %109 : vector<8x128xf32>
    %111 = vector.extract_strided_slice %108 {offsets = [0, 128], sizes = [8, 128], strides = [1, 1]} : vector<8x256xf32> to vector<8x128xf32>
    %112 = arith.addf %106, %111 : vector<8x128xf32>
    %113 = math.tanh %110 : vector<8x128xf32>
    %114 = arith.mulf %104, %113 : vector<8x128xf32>
    %115 = arith.maximumf %112, %84 : vector<8x128xf32>
    %116 = arith.subf %115, %84 : vector<8x128xf32>
    %117 = math.exp %116 : vector<8x128xf32>
    %118 = arith.mulf %114, %117 : vector<8x128xf32>
    %119 = arith.addf %88, %118 : vector<8x128xf32>
    %120 = arith.addf %89, %117 : vector<8x128xf32>
    %121 = tpu.reciprocal %120 {approx = true} : vector<8x128xf32> -> vector<8x128xf32>
    %122 = arith.mulf %120, %121 : vector<8x128xf32>
    %cst_31 = arith.constant 2.000000e+00 : f32
    %123 = vector.broadcast %cst_31 : f32 to vector<8x128xf32>
    %124 = arith.subf %123, %122 : vector<8x128xf32>
    %125 = arith.mulf %121, %124 : vector<8x128xf32>
    %126 = arith.mulf %119, %125 : vector<8x128xf32>
    %127 = math.tanh %126 : vector<8x128xf32>
    %128 = arith.index_cast %c3_i32 : i32 to index
    %c0_32 = arith.constant 0 : index
    %c0_33 = arith.constant 0 : index
    %129 = vector.load %arg5[%128, %c0_32, %c0_33] : memref<8x8x128xf32, #tpu.memory_space<vmem>>, vector<1x8x128xf32>
    %130 = vector.shape_cast %129 : vector<1x8x128xf32> to vector<8x128xf32>
    %131 = vector.shape_cast %127 : vector<8x128xf32> to vector<1x8x128xf32>
    tpu.vector_store %arg5[%128, %c0_32, %c0_33], %131 {strides = array<i32>} : memref<8x8x128xf32, #tpu.memory_space<vmem>>, vector<1x8x128xf32>,
    %c4_i32 = arith.constant 4 : i32
    %132 = arith.index_cast %c4_i32 : i32 to index
    %c0_34 = arith.constant 0 : index
    %c0_35 = arith.constant 0 : index
    %133 = vector.load %arg2[%132, %c0_34, %c0_35] : memref<8x8x384xf32, #tpu.memory_space<vmem>>, vector<1x8x384xf32>
    %134 = vector.shape_cast %133 : vector<1x8x384xf32> to vector<8x384xf32>
    %135 = vector.extract_strided_slice %134 {offsets = [0, 0], sizes = [8, 128], strides = [1, 1]} : vector<8x384xf32> to vector<8x128xf32>
    %136 = vector.extract_strided_slice %134 {offsets = [0, 128], sizes = [8, 128], strides = [1, 1]} : vector<8x384xf32> to vector<8x128xf32>
    %137 = vector.extract_strided_slice %134 {offsets = [0, 256], sizes = [8, 128], strides = [1, 1]} : vector<8x384xf32> to vector<8x128xf32>
    %138 = arith.truncf %127 : vector<8x128xf32> to vector<8x128xbf16>
    %cst_36 = arith.constant dense<0.000000e+00> : vector<8x256xf32>
    %139 = tpu.matmul %138, %3, %cst_36 {dimension_numbers = #tpu.dot_dimension_numbers<[1], [0], [0], [1], [0, 0, 1, 1], [], []>} : vector<8x128xbf16>, vector<128x256xbf16>, vector<8x256xf32> -> vector<8x256xf32>
    %140 = vector.extract_strided_slice %139 {offsets = [0, 0], sizes = [8, 128], strides = [1, 1]} : vector<8x256xf32> to vector<8x128xf32>
    %141 = arith.addf %136, %140 : vector<8x128xf32>
    %142 = vector.extract_strided_slice %139 {offsets = [0, 128], sizes = [8, 128], strides = [1, 1]} : vector<8x256xf32> to vector<8x128xf32>
    %143 = arith.addf %137, %142 : vector<8x128xf32>
    %144 = math.tanh %141 : vector<8x128xf32>
    %145 = arith.mulf %135, %144 : vector<8x128xf32>
    %146 = arith.maximumf %143, %115 : vector<8x128xf32>
    %147 = arith.subf %146, %115 : vector<8x128xf32>
    %148 = math.exp %147 : vector<8x128xf32>
    %149 = arith.mulf %145, %148 : vector<8x128xf32>
    %150 = arith.addf %119, %149 : vector<8x128xf32>
    %151 = arith.addf %120, %148 : vector<8x128xf32>
    %152 = tpu.reciprocal %151 {approx = true} : vector<8x128xf32> -> vector<8x128xf32>
    %153 = arith.mulf %151, %152 : vector<8x128xf32>
    %cst_37 = arith.constant 2.000000e+00 : f32
    %154 = vector.broadcast %cst_37 : f32 to vector<8x128xf32>
    %155 = arith.subf %154, %153 : vector<8x128xf32>
    %156 = arith.mulf %152, %155 : vector<8x128xf32>
    %157 = arith.mulf %150, %156 : vector<8x128xf32>
    %158 = math.tanh %157 : vector<8x128xf32>
    %159 = arith.index_cast %c4_i32 : i32 to index
    %c0_38 = arith.constant 0 : index
    %c0_39 = arith.constant 0 : index
    %160 = vector.load %arg5[%159, %c0_38, %c0_39] : memref<8x8x128xf32, #tpu.memory_space<vmem>>, vector<1x8x128xf32>
    %161 = vector.shape_cast %160 : vector<1x8x128xf32> to vector<8x128xf32>
    %162 = vector.shape_cast %158 : vector<8x128xf32> to vector<1x8x128xf32>
    tpu.vector_store %arg5[%159, %c0_38, %c0_39], %162 {strides = array<i32>} : memref<8x8x128xf32, #tpu.memory_space<vmem>>, vector<1x8x128xf32>,
    %c5_i32 = arith.constant 5 : i32
    %163 = arith.index_cast %c5_i32 : i32 to index
    %c0_40 = arith.constant 0 : index
    %c0_41 = arith.constant 0 : index
    %164 = vector.load %arg2[%163, %c0_40, %c0_41] : memref<8x8x384xf32, #tpu.memory_space<vmem>>, vector<1x8x384xf32>
    %165 = vector.shape_cast %164 : vector<1x8x384xf32> to vector<8x384xf32>
    %166 = vector.extract_strided_slice %165 {offsets = [0, 0], sizes = [8, 128], strides = [1, 1]} : vector<8x384xf32> to vector<8x128xf32>
    %167 = vector.extract_strided_slice %165 {offsets = [0, 128], sizes = [8, 128], strides = [1, 1]} : vector<8x384xf32> to vector<8x128xf32>
    %168 = vector.extract_strided_slice %165 {offsets = [0, 256], sizes = [8, 128], strides = [1, 1]} : vector<8x384xf32> to vector<8x128xf32>
    %169 = arith.truncf %158 : vector<8x128xf32> to vector<8x128xbf16>
    %cst_42 = arith.constant dense<0.000000e+00> : vector<8x256xf32>
    %170 = tpu.matmul %169, %3, %cst_42 {dimension_numbers = #tpu.dot_dimension_numbers<[1], [0], [0], [1], [0, 0, 1, 1], [], []>} : vector<8x128xbf16>, vector<128x256xbf16>, vector<8x256xf32> -> vector<8x256xf32>
    %171 = vector.extract_strided_slice %170 {offsets = [0, 0], sizes = [8, 128], strides = [1, 1]} : vector<8x256xf32> to vector<8x128xf32>
    %172 = arith.addf %167, %171 : vector<8x128xf32>
    %173 = vector.extract_strided_slice %170 {offsets = [0, 128], sizes = [8, 128], strides = [1, 1]} : vector<8x256xf32> to vector<8x128xf32>
    %174 = arith.addf %168, %173 : vector<8x128xf32>
    %175 = math.tanh %172 : vector<8x128xf32>
    %176 = arith.mulf %166, %175 : vector<8x128xf32>
    %177 = arith.maximumf %174, %146 : vector<8x128xf32>
    %178 = arith.subf %177, %146 : vector<8x128xf32>
    %179 = math.exp %178 : vector<8x128xf32>
    %180 = arith.mulf %176, %179 : vector<8x128xf32>
    %181 = arith.addf %150, %180 : vector<8x128xf32>
    %182 = arith.addf %151, %179 : vector<8x128xf32>
    %183 = tpu.reciprocal %182 {approx = true} : vector<8x128xf32> -> vector<8x128xf32>
    %184 = arith.mulf %182, %183 : vector<8x128xf32>
    %cst_43 = arith.constant 2.000000e+00 : f32
    %185 = vector.broadcast %cst_43 : f32 to vector<8x128xf32>
    %186 = arith.subf %185, %184 : vector<8x128xf32>
    %187 = arith.mulf %183, %186 : vector<8x128xf32>
    %188 = arith.mulf %181, %187 : vector<8x128xf32>
    %189 = math.tanh %188 : vector<8x128xf32>
    %190 = arith.index_cast %c5_i32 : i32 to index
    %c0_44 = arith.constant 0 : index
    %c0_45 = arith.constant 0 : index
    %191 = vector.load %arg5[%190, %c0_44, %c0_45] : memref<8x8x128xf32, #tpu.memory_space<vmem>>, vector<1x8x128xf32>
    %192 = vector.shape_cast %191 : vector<1x8x128xf32> to vector<8x128xf32>
    %193 = vector.shape_cast %189 : vector<8x128xf32> to vector<1x8x128xf32>
    tpu.vector_store %arg5[%190, %c0_44, %c0_45], %193 {strides = array<i32>} : memref<8x8x128xf32, #tpu.memory_space<vmem>>, vector<1x8x128xf32>,
    %c6_i32 = arith.constant 6 : i32
    %194 = arith.index_cast %c6_i32 : i32 to index
    %c0_46 = arith.constant 0 : index
    %c0_47 = arith.constant 0 : index
    %195 = vector.load %arg2[%194, %c0_46, %c0_47] : memref<8x8x384xf32, #tpu.memory_space<vmem>>, vector<1x8x384xf32>
    %196 = vector.shape_cast %195 : vector<1x8x384xf32> to vector<8x384xf32>
    %197 = vector.extract_strided_slice %196 {offsets = [0, 0], sizes = [8, 128], strides = [1, 1]} : vector<8x384xf32> to vector<8x128xf32>
    %198 = vector.extract_strided_slice %196 {offsets = [0, 128], sizes = [8, 128], strides = [1, 1]} : vector<8x384xf32> to vector<8x128xf32>
    %199 = vector.extract_strided_slice %196 {offsets = [0, 256], sizes = [8, 128], strides = [1, 1]} : vector<8x384xf32> to vector<8x128xf32>
    %200 = arith.truncf %189 : vector<8x128xf32> to vector<8x128xbf16>
    %cst_48 = arith.constant dense<0.000000e+00> : vector<8x256xf32>
    %201 = tpu.matmul %200, %3, %cst_48 {dimension_numbers = #tpu.dot_dimension_numbers<[1], [0], [0], [1], [0, 0, 1, 1], [], []>} : vector<8x128xbf16>, vector<128x256xbf16>, vector<8x256xf32> -> vector<8x256xf32>
    %202 = vector.extract_strided_slice %201 {offsets = [0, 0], sizes = [8, 128], strides = [1, 1]} : vector<8x256xf32> to vector<8x128xf32>
    %203 = arith.addf %198, %202 : vector<8x128xf32>
    %204 = vector.extract_strided_slice %201 {offsets = [0, 128], sizes = [8, 128], strides = [1, 1]} : vector<8x256xf32> to vector<8x128xf32>
    %205 = arith.addf %199, %204 : vector<8x128xf32>
    %206 = math.tanh %203 : vector<8x128xf32>
    %207 = arith.mulf %197, %206 : vector<8x128xf32>
    %208 = arith.maximumf %205, %177 : vector<8x128xf32>
    %209 = arith.subf %208, %177 : vector<8x128xf32>
    %210 = math.exp %209 : vector<8x128xf32>
    %211 = arith.mulf %207, %210 : vector<8x128xf32>
    %212 = arith.addf %181, %211 : vector<8x128xf32>
    %213 = arith.addf %182, %210 : vector<8x128xf32>
    %214 = tpu.reciprocal %213 {approx = true} : vector<8x128xf32> -> vector<8x128xf32>
    %215 = arith.mulf %213, %214 : vector<8x128xf32>
    %cst_49 = arith.constant 2.000000e+00 : f32
    %216 = vector.broadcast %cst_49 : f32 to vector<8x128xf32>
    %217 = arith.subf %216, %215 : vector<8x128xf32>
    %218 = arith.mulf %214, %217 : vector<8x128xf32>
    %219 = arith.mulf %212, %218 : vector<8x128xf32>
    %220 = math.tanh %219 : vector<8x128xf32>
    %221 = arith.index_cast %c6_i32 : i32 to index
    %c0_50 = arith.constant 0 : index
    %c0_51 = arith.constant 0 : index
    %222 = vector.load %arg5[%221, %c0_50, %c0_51] : memref<8x8x128xf32, #tpu.memory_space<vmem>>, vector<1x8x128xf32>
    %223 = vector.shape_cast %222 : vector<1x8x128xf32> to vector<8x128xf32>
    %224 = vector.shape_cast %220 : vector<8x128xf32> to vector<1x8x128xf32>
    tpu.vector_store %arg5[%221, %c0_50, %c0_51], %224 {strides = array<i32>} : memref<8x8x128xf32, #tpu.memory_space<vmem>>, vector<1x8x128xf32>,
    %c7_i32 = arith.constant 7 : i32
    %225 = arith.index_cast %c7_i32 : i32 to index
    %c0_52 = arith.constant 0 : index
    %c0_53 = arith.constant 0 : index
    %226 = vector.load %arg2[%225, %c0_52, %c0_53] : memref<8x8x384xf32, #tpu.memory_space<vmem>>, vector<1x8x384xf32>
    %227 = vector.shape_cast %226 : vector<1x8x384xf32> to vector<8x384xf32>
    %228 = vector.extract_strided_slice %227 {offsets = [0, 0], sizes = [8, 128], strides = [1, 1]} : vector<8x384xf32> to vector<8x128xf32>
    %229 = vector.extract_strided_slice %227 {offsets = [0, 128], sizes = [8, 128], strides = [1, 1]} : vector<8x384xf32> to vector<8x128xf32>
    %230 = vector.extract_strided_slice %227 {offsets = [0, 256], sizes = [8, 128], strides = [1, 1]} : vector<8x384xf32> to vector<8x128xf32>
    %231 = arith.truncf %220 : vector<8x128xf32> to vector<8x128xbf16>
    %cst_54 = arith.constant dense<0.000000e+00> : vector<8x256xf32>
    %232 = tpu.matmul %231, %3, %cst_54 {dimension_numbers = #tpu.dot_dimension_numbers<[1], [0], [0], [1], [0, 0, 1, 1], [], []>} : vector<8x128xbf16>, vector<128x256xbf16>, vector<8x256xf32> -> vector<8x256xf32>
    %233 = vector.extract_strided_slice %232 {offsets = [0, 0], sizes = [8, 128], strides = [1, 1]} : vector<8x256xf32> to vector<8x128xf32>
    %234 = arith.addf %229, %233 : vector<8x128xf32>
    %235 = vector.extract_strided_slice %232 {offsets = [0, 128], sizes = [8, 128], strides = [1, 1]} : vector<8x256xf32> to vector<8x128xf32>
    %236 = arith.addf %230, %235 : vector<8x128xf32>
    %237 = math.tanh %234 : vector<8x128xf32>
    %238 = arith.mulf %228, %237 : vector<8x128xf32>
    %239 = arith.maximumf %236, %208 : vector<8x128xf32>
    %240 = arith.subf %239, %208 : vector<8x128xf32>
    %241 = math.exp %240 : vector<8x128xf32>
    %242 = arith.mulf %238, %241 : vector<8x128xf32>
    %243 = arith.addf %212, %242 : vector<8x128xf32>
    %244 = arith.addf %213, %241 : vector<8x128xf32>
    %245 = tpu.reciprocal %244 {approx = true} : vector<8x128xf32> -> vector<8x128xf32>
    %246 = arith.mulf %244, %245 : vector<8x128xf32>
    %cst_55 = arith.constant 2.000000e+00 : f32
    %247 = vector.broadcast %cst_55 : f32 to vector<8x128xf32>
    %248 = arith.subf %247, %246 : vector<8x128xf32>
    %249 = arith.mulf %245, %248 : vector<8x128xf32>
    %250 = arith.mulf %243, %249 : vector<8x128xf32>
    %251 = math.tanh %250 : vector<8x128xf32>
    %252 = arith.index_cast %c7_i32 : i32 to index
    %c0_56 = arith.constant 0 : index
    %c0_57 = arith.constant 0 : index
    %253 = vector.load %arg5[%252, %c0_56, %c0_57] : memref<8x8x128xf32, #tpu.memory_space<vmem>>, vector<1x8x128xf32>
    %254 = vector.shape_cast %253 : vector<1x8x128xf32> to vector<8x128xf32>
    %255 = vector.shape_cast %251 : vector<8x128xf32> to vector<1x8x128xf32>
    tpu.vector_store %arg5[%252, %c0_56, %c0_57], %255 {strides = array<i32>} : memref<8x8x128xf32, #tpu.memory_space<vmem>>, vector<1x8x128xf32>,
    %c8_i32 = arith.constant 8 : i32
    %c0_58 = arith.constant 0 : index
    %c0_59 = arith.constant 0 : index
    %256 = vector.load %arg6[%c0_58, %c0_59] : memref<8x128xf32, #tpu.memory_space<vmem>>, vector<8x128xf32>
    tpu.vector_store %arg6[%c0_58, %c0_59], %243 {strides = array<i32>} : memref<8x128xf32, #tpu.memory_space<vmem>>, vector<8x128xf32>,
    %c0_60 = arith.constant 0 : index
    %c0_61 = arith.constant 0 : index
    %257 = vector.load %arg7[%c0_60, %c0_61] : memref<8x128xf32, #tpu.memory_space<vmem>>, vector<8x128xf32>
    tpu.vector_store %arg7[%c0_60, %c0_61], %244 {strides = array<i32>} : memref<8x128xf32, #tpu.memory_space<vmem>>, vector<8x128xf32>,
    %c0_62 = arith.constant 0 : index
    %c0_63 = arith.constant 0 : index
    %258 = vector.load %arg8[%c0_62, %c0_63] : memref<8x128xf32, #tpu.memory_space<vmem>>, vector<8x128xf32>
    tpu.vector_store %arg8[%c0_62, %c0_63], %251 {strides = array<i32>} : memref<8x128xf32, #tpu.memory_space<vmem>>, vector<8x128xf32>,
    %c0_64 = arith.constant 0 : index
    %c0_65 = arith.constant 0 : index
    %259 = vector.load %arg9[%c0_64, %c0_65] : memref<8x128xf32, #tpu.memory_space<vmem>>, vector<8x128xf32>
    tpu.vector_store %arg9[%c0_64, %c0_65], %239 {strides = array<i32>} : memref<8x128xf32, #tpu.memory_space<vmem>>, vector<8x128xf32>,
    return
  }
  func.func @transform_0(%arg0: i32, %arg1: i32) -> (i32, i32, i32) {
    %c0_i32 = arith.constant 0 : i32
    %c0_i32_0 = arith.constant 0 : i32
    return %arg1, %arg0, %c0_i32 : i32, i32, i32
  }
  func.func @transform_1(%arg0: i32, %arg1: i32) -> (i32, i32) {
    %c0_i32 = arith.constant 0 : i32
    %c0_i32_0 = arith.constant 0 : i32
    %c0_i32_1 = arith.constant 0 : i32
    return %c0_i32, %c0_i32_0 : i32, i32
  }
  func.func @transform_2(%arg0: i32, %arg1: i32) -> (i32, i32) {
    %c0_i32 = arith.constant 0 : i32
    %c0_i32_0 = arith.constant 0 : i32
    %c0_i32_1 = arith.constant 0 : i32
    return %c0_i32, %c0_i32_0 : i32, i32
  }
  func.func @transform_3(%arg0: i32, %arg1: i32) -> (i32, i32, i32) {
    %c0_i32 = arith.constant 0 : i32
    %c0_i32_0 = arith.constant 0 : i32
    return %arg1, %arg0, %c0_i32 : i32, i32, i32
  }
}

</mosaic_0001>

<llo_original>
// kernel: rwa_pallas.1
$region0: #{rwa_pallas.1}
  #allocation0 [shape = 'u32[]', space=smem, size = 0x4, offset = 0x4, fixed_abs, tag = 'smem constant byte address 0x4 - core index']
  #allocation1 [shape = 'u32[144,128]{1,0:T(1,128)}', space=vmem, size = 0x12000, scoped, tag = 'internal scratch']
  #allocation2 [shape = 'f32[8,128]{1,0:T(8,128)}', space=vmem, size = 0x1000, scoped, tag = 'scratch operand']
  #allocation3 [shape = 'f32[8,128]{1,0:T(8,128)}', space=vmem, size = 0x1000, scoped, tag = 'scratch operand']
  #allocation4 [shape = 'f32[8,128]{1,0:T(8,128)}', space=vmem, size = 0x1000, scoped, tag = 'scratch operand']
  #allocation5 [shape = 'f32[8,128]{1,0:T(8,128)}', space=vmem, size = 0x1000, scoped, tag = 'scratch operand']
  %s0 = inlined_call_operand.vmem [shape: f32[8,8,384], index: 0, kind: input, shape index: {}]
  %s1 = inlined_call_operand.vmem [shape: bf16[128,256], index: 1, kind: input, shape index: {}]
  %s2 = inlined_call_operand.vmem [shape: f32[1,128], index: 2, kind: input, shape index: {}]
  %s3 = inlined_call_operand.vmem [shape: f32[8,8,128], index: 3, kind: output, shape index: {}]
  %s4 = sld [smem:[#allocation0]]
  $region26: #{rwa_pallas.1} parent=0
    _
  %s6 = ssub.s32 1, %s4
  %s7 = scalar_select 0, %s6, %s4
  // Predicated region
  $region2: #{rwa_pallas.1} parent=0 // pred_check
    _
  $region3: #{rwa_pallas.1} parent=0 // pred_check_branch
    %9 = sbr.rel (0) target = $region5
  $region4: #{rwa_pallas.1} parent=0 // pred_region
    _
  $region5: #{rwa_pallas.1} parent=0 // pred_fallthru
    _
  // Predicated region
  $region6: #{rwa_pallas.1} parent=0 // pred_check
    _
  $region7: #{rwa_pallas.1} parent=0 // pred_check_branch
    %11 = sbr.rel (0) target = $region9
  $region8: #{rwa_pallas.1} parent=0 // pred_region
    _
  $region9: #{rwa_pallas.1} parent=0 // pred_fallthru
    _
  // Predicated region
  $region10: #{rwa_pallas.1} parent=0 // pred_check
    _
  $region11: #{rwa_pallas.1} parent=0 // pred_check_branch
    %13 = sbr.rel (0) target = $region13
  $region12: #{rwa_pallas.1} parent=0 // pred_region
    _
  $region13: #{rwa_pallas.1} parent=0 // pred_fallthru
    _
  %p15 = scmp.eq.s32.totalorder 0, 0
  // Predicated region
  $region14: #{rwa_pallas.1} parent=0 // pred_check
    %p16 = pneg %p15
  $region15: #{rwa_pallas.1} parent=0 // pred_check_branch
    %18 = sbr.rel (%p16) target = $region17
  $region16: #{rwa_pallas.1} parent=0 // pred_region
    %v19 = vld [vmem:[%s2] sm:$0x1]
    %v21 = vlaneseq
    %v22 = vshrl.u32 %v21, 7
    %v23 = vsub.s32 0, %v22
    %v24 = vrot.slane %v19, %v23
    %v26 = vtanh.pop %v24
    %27 = vst [vmem:[#allocation4] sm:$0xff] %v26
    %28 = vst [vmem:[#allocation2] sm:$0xff] 0.0
    %29 = vst [vmem:[#allocation3] sm:$0xff] 0.0
    %30 = vst [vmem:[#allocation5] sm:$0xff] 1e-38
  $region17: #{rwa_pallas.1} parent=0 // pred_fallthru
    _
  %v31 = vld [vmem:[%s1] sm:$0xff]
  %v32 = vld [vmem:[%s1 + $0x8] sm:$0xff]
  %v33 = vld [vmem:[%s1 + $0x10] sm:$0xff]
  %v34 = vld [vmem:[%s1 + $0x18] sm:$0xff]
  %v35 = vld [vmem:[%s1 + $0x20] sm:$0xff]
  %v36 = vld [vmem:[%s1 + $0x28] sm:$0xff]
  %v37 = vld [vmem:[%s1 + $0x30] sm:$0xff]
  %v38 = vld [vmem:[%s1 + $0x38] sm:$0xff]
  %v39 = vld [vmem:[%s1 + $0x40] sm:$0xff]
  %v40 = vld [vmem:[%s1 + $0x48] sm:$0xff]
  %v41 = vld [vmem:[%s1 + $0x50] sm:$0xff]
  %v42 = vld [vmem:[%s1 + $0x58] sm:$0xff]
  %v43 = vld [vmem:[%s1 + $0x60] sm:$0xff]
  %v44 = vld [vmem:[%s1 + $0x68] sm:$0xff]
  %v45 = vld [vmem:[%s1 + $0x70] sm:$0xff]
  %v46 = vld [vmem:[%s1 + $0x78] sm:$0xff]
  %v47 = vld [vmem:[#allocation2] sm:$0xff]
  %v48 = vld [vmem:[#allocation3] sm:$0xff]
  %v49 = vld [vmem:[#allocation4] sm:$0xff]
  %v50 = vld [vmem:[#allocation5] sm:$0xff]
  %v51 = vld [vmem:[%s0] sm:$0xff]
  %v52 = vld [vmem:[%s0 + $0x8] sm:$0xff]
  %v53 = vld [vmem:[%s0 + $0x10] sm:$0xff]
  %v54 = vpack.c.bf16 %v49, %v49
  %v71 = vunpack.c.l.b16 %v31
  %v72 = vunpack.c.h.b16 %v31
  %v73 = vunpack.c.l.b16 %v32
  %v74 = vunpack.c.h.b16 %v32
  %v75 = vunpack.c.l.b16 %v33
  %v76 = vunpack.c.h.b16 %v33
  %v77 = vunpack.c.l.b16 %v34
  %v78 = vunpack.c.h.b16 %v34
  %v79 = vunpack.c.l.b16 %v35
  %v80 = vunpack.c.h.b16 %v35
  %v81 = vunpack.c.l.b16 %v36
  %v82 = vunpack.c.h.b16 %v36
  %v83 = vunpack.c.l.b16 %v37
  %v84 = vunpack.c.h.b16 %v37
  %v85 = vunpack.c.l.b16 %v38
  %v86 = vunpack.c.h.b16 %v38
  %v87 = vunpack.c.l.b16 %v39
  %v88 = vunpack.c.h.b16 %v39
  %v89 = vunpack.c.l.b16 %v40
  %v90 = vunpack.c.h.b16 %v40
  %v91 = vunpack.c.l.b16 %v41
  %v92 = vunpack.c.h.b16 %v41
  %v93 = vunpack.c.l.b16 %v42
  %v94 = vunpack.c.h.b16 %v42
  %v95 = vunpack.c.l.b16 %v43
  %v96 = vunpack.c.h.b16 %v43
  %v97 = vunpack.c.l.b16 %v44
  %v98 = vunpack.c.h.b16 %v44
  %v99 = vunpack.c.l.b16 %v45
  %v100 = vunpack.c.h.b16 %v45
  %v101 = vunpack.c.l.b16 %v46
  %v102 = vunpack.c.h.b16 %v46
  %v103 = vpack.c.b16 %v73, %v71
  %v104 = vpack.c.b16 %v74, %v72
  %v105 = vpack.c.b16 %v77, %v75
  %v106 = vpack.c.b16 %v78, %v76
  %v107 = vpack.c.b16 %v81, %v79
  %v108 = vpack.c.b16 %v82, %v80
  %v109 = vpack.c.b16 %v85, %v83
  %v110 = vpack.c.b16 %v86, %v84
  %v111 = vpack.c.b16 %v89, %v87
  %v112 = vpack.c.b16 %v90, %v88
  %v113 = vpack.c.b16 %v93, %v91
  %v114 = vpack.c.b16 %v94, %v92
  %v115 = vpack.c.b16 %v97, %v95
  %v116 = vpack.c.b16 %v98, %v96
  %v117 = vpack.c.b16 %v101, %v99
  %v118 = vpack.c.b16 %v102, %v100
  %135 = vmatprep.subr.bf16.mxu0 %v104
  %136 = vmatpush1.bf16.msra.mxu0 %v103
  %137 = vmatprep.subr.bf16.mxu0 %v106
  %138 = vmatpush1.bf16.msra.mxu0 %v105
  %139 = vmatprep.subr.bf16.mxu0 %v108
  %140 = vmatpush1.bf16.msra.mxu0 %v107
  %141 = vmatprep.subr.bf16.mxu0 %v110
  %142 = vmatpush1.bf16.msra.mxu0 %v109
  %143 = vmatprep.subr.bf16.mxu0 %v112
  %144 = vmatpush1.bf16.msra.mxu0 %v111
  %145 = vmatprep.subr.bf16.mxu0 %v114
  %146 = vmatpush1.bf16.msra.mxu0 %v113
  %147 = vmatprep.subr.bf16.mxu0 %v116
  %148 = vmatpush1.bf16.msra.mxu0 %v115
  %149 = vmatprep.subr.bf16.mxu0 %v118
  %150 = vmatpush1.bf16.msra.mxu0 %v117
  %151 = vmatprep.subr.bf16.mxu0 0
  %152 = vmatpush1.bf16.msra.mxu0 0
  %153 = vmatprep.subr.bf16.mxu0 0
  %154 = vmatpush1.bf16.msra.mxu0 0
  %155 = vmatprep.subr.bf16.mxu0 0
  %156 = vmatpush1.bf16.msra.mxu0 0
  %157 = vmatprep.subr.bf16.mxu0 0
  %158 = vmatpush1.bf16.msra.mxu0 0
  %159 = vmatprep.subr.bf16.mxu0 0
  %160 = vmatpush1.bf16.msra.mxu0 0
  %161 = vmatprep.subr.bf16.mxu0 0
  %162 = vmatpush1.bf16.msra.mxu0 0
  %163 = vmatprep.subr.bf16.mxu0 0
  %164 = vmatpush1.bf16.msra.mxu0 0
  %165 = vmatprep.subr.bf16.mxu0 0
  %166 = vmatpush1.bf16.msra.mxu0 0
  %167 = vmatprep.mubr.bf16.mxu0 0
  %168 = vmatmul.mubr.bf16.gmra.mrb[0].mxu0 %v54
  %v169 = vpop.f32.mrb[0].mxu0
  %v170 = vadd.f32 0.0, %v169
  %v171 = vpop.f32.mrb[0].mxu0
  %v172 = vadd.f32 0.0, %v171
  %v173 = vpop.f32.mrb[0].mxu0
  %v174 = vpop.f32.mrb[0].mxu0
  %175 = vdwg.mxu0
  %v176 = vadd.f32 %v52, %v170
  %v177 = vadd.f32 %v53, %v172
  %v178 = vtanh.pop %v176
  %v179 = vmul.f32 %v51, %v178
  %v180 = vmax.f32 %v177, %v50
  %v181 = vsub.f32 %v180, %v50
  %v182 = vmul.f32 %v181, 1.442695
  %v183 = vpow.pop %v182
  %v184 = vmul.f32 %v179, %v183
  %v185 = vadd.f32 %v47, %v184
  %v186 = vadd.f32 %v48, %v183
  %v187 = vrcp.pop %v186
  %v188 = vmul.f32 %v186, %v187
  %v189 = vsub.f32 2.0, %v188
  %v190 = vmul.f32 %v187, %v189
  %v191 = vmul.f32 %v185, %v190
  %v192 = vtanh.pop %v191
  %193 = vst [vmem:[%s3] sm:$0xff] %v192
  %s194 = scalar_lea.vmem %s0, 24
  %v195 = vld [vmem:[%s194] sm:$0xff]
  %v196 = vld [vmem:[%s194 + $0x8] sm:$0xff]
  %v197 = vld [vmem:[%s194 + $0x10] sm:$0xff]
  %v198 = vpack.c.bf16 %v192, %v192
  %199 = vmatprep.subr.bf16.mxu0 %v104
  %200 = vmatpush1.bf16.msra.mxu0 %v103
  %201 = vmatprep.subr.bf16.mxu0 %v106
  %202 = vmatpush1.bf16.msra.mxu0 %v105
  %203 = vmatprep.subr.bf16.mxu0 %v108
  %204 = vmatpush1.bf16.msra.mxu0 %v107
  %205 = vmatprep.subr.bf16.mxu0 %v110
  %206 = vmatpush1.bf16.msra.mxu0 %v109
  %207 = vmatprep.subr.bf16.mxu0 %v112
  %208 = vmatpush1.bf16.msra.mxu0 %v111
  %209 = vmatprep.subr.bf16.mxu0 %v114
  %210 = vmatpush1.bf16.msra.mxu0 %v113
  %211 = vmatprep.subr.bf16.mxu0 %v116
  %212 = vmatpush1.bf16.msra.mxu0 %v115
  %213 = vmatprep.subr.bf16.mxu0 %v118
  %214 = vmatpush1.bf16.msra.mxu0 %v117
  %215 = vmatprep.subr.bf16.mxu0 0
  %216 = vmatpush1.bf16.msra.mxu0 0
  %217 = vmatprep.subr.bf16.mxu0 0
  %218 = vmatpush1.bf16.msra.mxu0 0
  %219 = vmatprep.subr.bf16.mxu0 0
  %220 = vmatpush1.bf16.msra.mxu0 0
  %221 = vmatprep.subr.bf16.mxu0 0
  %222 = vmatpush1.bf16.msra.mxu0 0
  %223 = vmatprep.subr.bf16.mxu0 0
  %224 = vmatpush1.bf16.msra.mxu0 0
  %225 = vmatprep.subr.bf16.mxu0 0
  %226 = vmatpush1.bf16.msra.mxu0 0
  %227 = vmatprep.subr.bf16.mxu0 0
  %228 = vmatpush1.bf16.msra.mxu0 0
  %229 = vmatprep.subr.bf16.mxu0 0
  %230 = vmatpush1.bf16.msra.mxu0 0
  %231 = vmatprep.mubr.bf16.mxu0 0
  %232 = vmatmul.mubr.bf16.gmra.mrb[0].mxu0 %v198
  %v233 = vpop.f32.mrb[0].mxu0
  %v234 = vadd.f32 0.0, %v233
  %v235 = vpop.f32.mrb[0].mxu0
  %v236 = vadd.f32 0.0, %v235
  %v237 = vpop.f32.mrb[0].mxu0
  %v238 = vpop.f32.mrb[0].mxu0
  %239 = vdwg.mxu0
  %v240 = vadd.f32 %v196, %v234
  %v241 = vadd.f32 %v197, %v236
  %v242 = vtanh.pop %v240
  %v243 = vmul.f32 %v195, %v242
  %v244 = vmax.f32 %v241, %v180
  %v245 = vsub.f32 %v244, %v180
  %v246 = vmul.f32 %v245, 1.442695
  %v247 = vpow.pop %v246
  %v248 = vmul.f32 %v243, %v247
  %v249 = vadd.f32 %v185, %v248
  %v250 = vadd.f32 %v186, %v247
  %v251 = vrcp.pop %v250
  %v252 = vmul.f32 %v250, %v251
  %v253 = vsub.f32 2.0, %v252
  %v254 = vmul.f32 %v251, %v253
  %v255 = vmul.f32 %v249, %v254
  %v256 = vtanh.pop %v255
  %s257 = scalar_lea.vmem %s3, 8
  %258 = vst [vmem:[%s257] sm:$0xff] %v256
  %s259 = scalar_lea.vmem %s0, 48
  %v260 = vld [vmem:[%s259] sm:$0xff]
  %v261 = vld [vmem:[%s259 + $0x8] sm:$0xff]
  %v262 = vld [vmem:[%s259 + $0x10] sm:$0xff]
  %v263 = vpack.c.bf16 %v256, %v256
  %264 = vmatprep.subr.bf16.mxu0 %v104
  %265 = vmatpush1.bf16.msra.mxu0 %v103
  %266 = vmatprep.subr.bf16.mxu0 %v106
  %267 = vmatpush1.bf16.msra.mxu0 %v105
  %268 = vmatprep.subr.bf16.mxu0 %v108
  %269 = vmatpush1.bf16.msra.mxu0 %v107
  %270 = vmatprep.subr.bf16.mxu0 %v110
  %271 = vmatpush1.bf16.msra.mxu0 %v109
  %272 = vmatprep.subr.bf16.mxu0 %v112
  %273 = vmatpush1.bf16.msra.mxu0 %v111
  %274 = vmatprep.subr.bf16.mxu0 %v114
  %275 = vmatpush1.bf16.msra.mxu0 %v113
  %276 = vmatprep.subr.bf16.mxu0 %v116
  %277 = vmatpush1.bf16.msra.mxu0 %v115
  %278 = vmatprep.subr.bf16.mxu0 %v118
  %279 = vmatpush1.bf16.msra.mxu0 %v117
  %280 = vmatprep.subr.bf16.mxu0 0
  %281 = vmatpush1.bf16.msra.mxu0 0
  %282 = vmatprep.subr.bf16.mxu0 0
  %283 = vmatpush1.bf16.msra.mxu0 0
  %284 = vmatprep.subr.bf16.mxu0 0
  %285 = vmatpush1.bf16.msra.mxu0 0
  %286 = vmatprep.subr.bf16.mxu0 0
  %287 = vmatpush1.bf16.msra.mxu0 0
  %288 = vmatprep.subr.bf16.mxu0 0
  %289 = vmatpush1.bf16.msra.mxu0 0
  %290 = vmatprep.subr.bf16.mxu0 0
  %291 = vmatpush1.bf16.msra.mxu0 0
  %292 = vmatprep.subr.bf16.mxu0 0
  %293 = vmatpush1.bf16.msra.mxu0 0
  %294 = vmatprep.subr.bf16.mxu0 0
  %295 = vmatpush1.bf16.msra.mxu0 0
  %296 = vmatprep.mubr.bf16.mxu0 0
  %297 = vmatmul.mubr.bf16.gmra.mrb[0].mxu0 %v263
  %v298 = vpop.f32.mrb[0].mxu0
  %v299 = vadd.f32 0.0, %v298
  %v300 = vpop.f32.mrb[0].mxu0
  %v301 = vadd.f32 0.0, %v300
  %v302 = vpop.f32.mrb[0].mxu0
  %v303 = vpop.f32.mrb[0].mxu0
  %304 = vdwg.mxu0
  %v305 = vadd.f32 %v261, %v299
  %v306 = vadd.f32 %v262, %v301
  %v307 = vtanh.pop %v305
  %v308 = vmul.f32 %v260, %v307
  %v309 = vmax.f32 %v306, %v244
  %v310 = vsub.f32 %v309, %v244
  %v311 = vmul.f32 %v310, 1.442695
  %v312 = vpow.pop %v311
  %v313 = vmul.f32 %v308, %v312
  %v314 = vadd.f32 %v249, %v313
  %v315 = vadd.f32 %v250, %v312
  %v316 = vrcp.pop %v315
  %v317 = vmul.f32 %v315, %v316
  %v318 = vsub.f32 2.0, %v317
  %v319 = vmul.f32 %v316, %v318
  %v320 = vmul.f32 %v314, %v319
  %v321 = vtanh.pop %v320
  %s322 = scalar_lea.vmem %s3, 16
  %323 = vst [vmem:[%s322] sm:$0xff] %v321
  %s324 = scalar_lea.vmem %s0, 72
  %v325 = vld [vmem:[%s324] sm:$0xff]
  %v326 = vld [vmem:[%s324 + $0x8] sm:$0xff]
  %v327 = vld [vmem:[%s324 + $0x10] sm:$0xff]
  %v328 = vpack.c.bf16 %v321, %v321
  %329 = vmatprep.subr.bf16.mxu0 %v104
  %330 = vmatpush1.bf16.msra.mxu0 %v103
  %331 = vmatprep.subr.bf16.mxu0 %v106
  %332 = vmatpush1.bf16.msra.mxu0 %v105
  %333 = vmatprep.subr.bf16.mxu0 %v108
  %334 = vmatpush1.bf16.msra.mxu0 %v107
  %335 = vmatprep.subr.bf16.mxu0 %v110
  %336 = vmatpush1.bf16.msra.mxu0 %v109
  %337 = vmatprep.subr.bf16.mxu0 %v112
  %338 = vmatpush1.bf16.msra.mxu0 %v111
  %339 = vmatprep.subr.bf16.mxu0 %v114
  %340 = vmatpush1.bf16.msra.mxu0 %v113
  %341 = vmatprep.subr.bf16.mxu0 %v116
  %342 = vmatpush1.bf16.msra.mxu0 %v115
  %343 = vmatprep.subr.bf16.mxu0 %v118
  %344 = vmatpush1.bf16.msra.mxu0 %v117
  %345 = vmatprep.subr.bf16.mxu0 0
  %346 = vmatpush1.bf16.msra.mxu0 0
  %347 = vmatprep.subr.bf16.mxu0 0
  %348 = vmatpush1.bf16.msra.mxu0 0
  %349 = vmatprep.subr.bf16.mxu0 0
  %350 = vmatpush1.bf16.msra.mxu0 0
  %351 = vmatprep.subr.bf16.mxu0 0
  %352 = vmatpush1.bf16.msra.mxu0 0
  %353 = vmatprep.subr.bf16.mxu0 0
  %354 = vmatpush1.bf16.msra.mxu0 0
  %355 = vmatprep.subr.bf16.mxu0 0
  %356 = vmatpush1.bf16.msra.mxu0 0
  %357 = vmatprep.subr.bf16.mxu0 0
  %358 = vmatpush1.bf16.msra.mxu0 0
  %359 = vmatprep.subr.bf16.mxu0 0
  %360 = vmatpush1.bf16.msra.mxu0 0
  %361 = vmatprep.mubr.bf16.mxu0 0
  %362 = vmatmul.mubr.bf16.gmra.mrb[0].mxu0 %v328
  %v363 = vpop.f32.mrb[0].mxu0
  %v364 = vadd.f32 0.0, %v363
  %v365 = vpop.f32.mrb[0].mxu0
  %v366 = vadd.f32 0.0, %v365
  %v367 = vpop.f32.mrb[0].mxu0
  %v368 = vpop.f32.mrb[0].mxu0
  %369 = vdwg.mxu0
  %v370 = vadd.f32 %v326, %v364
  %v371 = vadd.f32 %v327, %v366
  %v372 = vtanh.pop %v370
  %v373 = vmul.f32 %v325, %v372
  %v374 = vmax.f32 %v371, %v309
  %v375 = vsub.f32 %v374, %v309
  %v376 = vmul.f32 %v375, 1.442695
  %v377 = vpow.pop %v376
  %v378 = vmul.f32 %v373, %v377
  %v379 = vadd.f32 %v314, %v378
  %v380 = vadd.f32 %v315, %v377
  %v381 = vrcp.pop %v380
  %v382 = vmul.f32 %v380, %v381
  %v383 = vsub.f32 2.0, %v382
  %v384 = vmul.f32 %v381, %v383
  %v385 = vmul.f32 %v379, %v384
  %v386 = vtanh.pop %v385
  %s387 = scalar_lea.vmem %s3, 24
  %388 = vst [vmem:[%s387] sm:$0xff] %v386
  %s389 = scalar_lea.vmem %s0, 96
  %v390 = vld [vmem:[%s389] sm:$0xff]
  %v391 = vld [vmem:[%s389 + $0x8] sm:$0xff]
  %v392 = vld [vmem:[%s389 + $0x10] sm:$0xff]
  %v393 = vpack.c.bf16 %v386, %v386
  %394 = vmatprep.subr.bf16.mxu0 %v104
  %395 = vmatpush1.bf16.msra.mxu0 %v103
  %396 = vmatprep.subr.bf16.mxu0 %v106
  %397 = vmatpush1.bf16.msra.mxu0 %v105
  %398 = vmatprep.subr.bf16.mxu0 %v108
  %399 = vmatpush1.bf16.msra.mxu0 %v107
  %400 = vmatprep.subr.bf16.mxu0 %v110
  %401 = vmatpush1.bf16.msra.mxu0 %v109
  %402 = vmatprep.subr.bf16.mxu0 %v112
  %403 = vmatpush1.bf16.msra.mxu0 %v111
  %404 = vmatprep.subr.bf16.mxu0 %v114
  %405 = vmatpush1.bf16.msra.mxu0 %v113
  %406 = vmatprep.subr.bf16.mxu0 %v116
  %407 = vmatpush1.bf16.msra.mxu0 %v115
  %408 = vmatprep.subr.bf16.mxu0 %v118
  %409 = vmatpush1.bf16.msra.mxu0 %v117
  %410 = vmatprep.subr.bf16.mxu0 0
  %411 = vmatpush1.bf16.msra.mxu0 0
  %412 = vmatprep.subr.bf16.mxu0 0
  %413 = vmatpush1.bf16.msra.mxu0 0
  %414 = vmatprep.subr.bf16.mxu0 0
  %415 = vmatpush1.bf16.msra.mxu0 0
  %416 = vmatprep.subr.bf16.mxu0 0
  %417 = vmatpush1.bf16.msra.mxu0 0
  %418 = vmatprep.subr.bf16.mxu0 0
  %419 = vmatpush1.bf16.msra.mxu0 0
  %420 = vmatprep.subr.bf16.mxu0 0
  %421 = vmatpush1.bf16.msra.mxu0 0
  %422 = vmatprep.subr.bf16.mxu0 0
  %423 = vmatpush1.bf16.msra.mxu0 0
  %424 = vmatprep.subr.bf16.mxu0 0
  %425 = vmatpush1.bf16.msra.mxu0 0
  %426 = vmatprep.mubr.bf16.mxu0 0
  %427 = vmatmul.mubr.bf16.gmra.mrb[0].mxu0 %v393
  %v428 = vpop.f32.mrb[0].mxu0
  %v429 = vadd.f32 0.0, %v428
  %v430 = vpop.f32.mrb[0].mxu0
  %v431 = vadd.f32 0.0, %v430
  %v432 = vpop.f32.mrb[0].mxu0
  %v433 = vpop.f32.mrb[0].mxu0
  %434 = vdwg.mxu0
  %v435 = vadd.f32 %v391, %v429
  %v436 = vadd.f32 %v392, %v431
  %v437 = vtanh.pop %v435
  %v438 = vmul.f32 %v390, %v437
  %v439 = vmax.f32 %v436, %v374
  %v440 = vsub.f32 %v439, %v374
  %v441 = vmul.f32 %v440, 1.442695
  %v442 = vpow.pop %v441
  %v443 = vmul.f32 %v438, %v442
  %v444 = vadd.f32 %v379, %v443
  %v445 = vadd.f32 %v380, %v442
  %v446 = vrcp.pop %v445
  %v447 = vmul.f32 %v445, %v446
  %v448 = vsub.f32 2.0, %v447
  %v449 = vmul.f32 %v446, %v448
  %v450 = vmul.f32 %v444, %v449
  %v451 = vtanh.pop %v450
  %s452 = scalar_lea.vmem %s3, 32
  %453 = vst [vmem:[%s452] sm:$0xff] %v451
  %s454 = scalar_lea.vmem %s0, 120
  %v455 = vld [vmem:[%s454] sm:$0xff]
  %v456 = vld [vmem:[%s454 + $0x8] sm:$0xff]
  %v457 = vld [vmem:[%s454 + $0x10] sm:$0xff]
  %v458 = vpack.c.bf16 %v451, %v451
  %459 = vmatprep.subr.bf16.mxu0 %v104
  %460 = vmatpush1.bf16.msra.mxu0 %v103
  %461 = vmatprep.subr.bf16.mxu0 %v106
  %462 = vmatpush1.bf16.msra.mxu0 %v105
  %463 = vmatprep.subr.bf16.mxu0 %v108
  %464 = vmatpush1.bf16.msra.mxu0 %v107
  %465 = vmatprep.subr.bf16.mxu0 %v110
  %466 = vmatpush1.bf16.msra.mxu0 %v109
  %467 = vmatprep.subr.bf16.mxu0 %v112
  %468 = vmatpush1.bf16.msra.mxu0 %v111
  %469 = vmatprep.subr.bf16.mxu0 %v114
  %470 = vmatpush1.bf16.msra.mxu0 %v113
  %471 = vmatprep.subr.bf16.mxu0 %v116
  %472 = vmatpush1.bf16.msra.mxu0 %v115
  %473 = vmatprep.subr.bf16.mxu0 %v118
  %474 = vmatpush1.bf16.msra.mxu0 %v117
  %475 = vmatprep.subr.bf16.mxu0 0
  %476 = vmatpush1.bf16.msra.mxu0 0
  %477 = vmatprep.subr.bf16.mxu0 0
  %478 = vmatpush1.bf16.msra.mxu0 0
  %479 = vmatprep.subr.bf16.mxu0 0
  %480 = vmatpush1.bf16.msra.mxu0 0
  %481 = vmatprep.subr.bf16.mxu0 0
  %482 = vmatpush1.bf16.msra.mxu0 0
  %483 = vmatprep.subr.bf16.mxu0 0
  %484 = vmatpush1.bf16.msra.mxu0 0
  %485 = vmatprep.subr.bf16.mxu0 0
  %486 = vmatpush1.bf16.msra.mxu0 0
  %487 = vmatprep.subr.bf16.mxu0 0
  %488 = vmatpush1.bf16.msra.mxu0 0
  %489 = vmatprep.subr.bf16.mxu0 0
  %490 = vmatpush1.bf16.msra.mxu0 0
  %491 = vmatprep.mubr.bf16.mxu0 0
  %492 = vmatmul.mubr.bf16.gmra.mrb[0].mxu0 %v458
  %v493 = vpop.f32.mrb[0].mxu0
  %v494 = vadd.f32 0.0, %v493
  %v495 = vpop.f32.mrb[0].mxu0
  %v496 = vadd.f32 0.0, %v495
  %v497 = vpop.f32.mrb[0].mxu0
  %v498 = vpop.f32.mrb[0].mxu0
  %499 = vdwg.mxu0
  %v500 = vadd.f32 %v456, %v494
  %v501 = vadd.f32 %v457, %v496
  %v502 = vtanh.pop %v500
  %v503 = vmul.f32 %v455, %v502
  %v504 = vmax.f32 %v501, %v439
  %v505 = vsub.f32 %v504, %v439
  %v506 = vmul.f32 %v505, 1.442695
  %v507 = vpow.pop %v506
  %v508 = vmul.f32 %v503, %v507
  %v509 = vadd.f32 %v444, %v508
  %v510 = vadd.f32 %v445, %v507
  %v511 = vrcp.pop %v510
  %v512 = vmul.f32 %v510, %v511
  %v513 = vsub.f32 2.0, %v512
  %v514 = vmul.f32 %v511, %v513
  %v515 = vmul.f32 %v509, %v514
  %v516 = vtanh.pop %v515
  %s517 = scalar_lea.vmem %s3, 40
  %518 = vst [vmem:[%s517] sm:$0xff] %v516
  %s519 = scalar_lea.vmem %s0, 144
  %v520 = vld [vmem:[%s519] sm:$0xff]
  %v521 = vld [vmem:[%s519 + $0x8] sm:$0xff]
  %v522 = vld [vmem:[%s519 + $0x10] sm:$0xff]
  %v523 = vpack.c.bf16 %v516, %v516
  %524 = vmatprep.subr.bf16.mxu0 %v104
  %525 = vmatpush1.bf16.msra.mxu0 %v103
  %526 = vmatprep.subr.bf16.mxu0 %v106
  %527 = vmatpush1.bf16.msra.mxu0 %v105
  %528 = vmatprep.subr.bf16.mxu0 %v108
  %529 = vmatpush1.bf16.msra.mxu0 %v107
  %530 = vmatprep.subr.bf16.mxu0 %v110
  %531 = vmatpush1.bf16.msra.mxu0 %v109
  %532 = vmatprep.subr.bf16.mxu0 %v112
  %533 = vmatpush1.bf16.msra.mxu0 %v111
  %534 = vmatprep.subr.bf16.mxu0 %v114
  %535 = vmatpush1.bf16.msra.mxu0 %v113
  %536 = vmatprep.subr.bf16.mxu0 %v116
  %537 = vmatpush1.bf16.msra.mxu0 %v115
  %538 = vmatprep.subr.bf16.mxu0 %v118
  %539 = vmatpush1.bf16.msra.mxu0 %v117
  %540 = vmatprep.subr.bf16.mxu0 0
  %541 = vmatpush1.bf16.msra.mxu0 0
  %542 = vmatprep.subr.bf16.mxu0 0
  %543 = vmatpush1.bf16.msra.mxu0 0
  %544 = vmatprep.subr.bf16.mxu0 0
  %545 = vmatpush1.bf16.msra.mxu0 0
  %546 = vmatprep.subr.bf16.mxu0 0
  %547 = vmatpush1.bf16.msra.mxu0 0
  %548 = vmatprep.subr.bf16.mxu0 0
  %549 = vmatpush1.bf16.msra.mxu0 0
  %550 = vmatprep.subr.bf16.mxu0 0
  %551 = vmatpush1.bf16.msra.mxu0 0
  %552 = vmatprep.subr.bf16.mxu0 0
  %553 = vmatpush1.bf16.msra.mxu0 0
  %554 = vmatprep.subr.bf16.mxu0 0
  %555 = vmatpush1.bf16.msra.mxu0 0
  %556 = vmatprep.mubr.bf16.mxu0 0
  %557 = vmatmul.mubr.bf16.gmra.mrb[0].mxu0 %v523
  %v558 = vpop.f32.mrb[0].mxu0
  %v559 = vadd.f32 0.0, %v558
  %v560 = vpop.f32.mrb[0].mxu0
  %v561 = vadd.f32 0.0, %v560
  %v562 = vpop.f32.mrb[0].mxu0
  %v563 = vpop.f32.mrb[0].mxu0
  %564 = vdwg.mxu0
  %v565 = vadd.f32 %v521, %v559
  %v566 = vadd.f32 %v522, %v561
  %v567 = vtanh.pop %v565
  %v568 = vmul.f32 %v520, %v567
  %v569 = vmax.f32 %v566, %v504
  %v570 = vsub.f32 %v569, %v504
  %v571 = vmul.f32 %v570, 1.442695
  %v572 = vpow.pop %v571
  %v573 = vmul.f32 %v568, %v572
  %v574 = vadd.f32 %v509, %v573
  %v575 = vadd.f32 %v510, %v572
  %v576 = vrcp.pop %v575
  %v577 = vmul.f32 %v575, %v576
  %v578 = vsub.f32 2.0, %v577
  %v579 = vmul.f32 %v576, %v578
  %v580 = vmul.f32 %v574, %v579
  %v581 = vtanh.pop %v580
  %s582 = scalar_lea.vmem %s3, 48
  %583 = vst [vmem:[%s582] sm:$0xff] %v581
  %s584 = scalar_lea.vmem %s0, 168
  %v585 = vld [vmem:[%s584] sm:$0xff]
  %v586 = vld [vmem:[%s584 + $0x8] sm:$0xff]
  %v587 = vld [vmem:[%s584 + $0x10] sm:$0xff]
  %v588 = vpack.c.bf16 %v581, %v581
  %589 = vmatprep.subr.bf16.mxu0 %v104
  %590 = vmatpush1.bf16.msra.mxu0 %v103
  %591 = vmatprep.subr.bf16.mxu0 %v106
  %592 = vmatpush1.bf16.msra.mxu0 %v105
  %593 = vmatprep.subr.bf16.mxu0 %v108
  %594 = vmatpush1.bf16.msra.mxu0 %v107
  %595 = vmatprep.subr.bf16.mxu0 %v110
  %596 = vmatpush1.bf16.msra.mxu0 %v109
  %597 = vmatprep.subr.bf16.mxu0 %v112
  %598 = vmatpush1.bf16.msra.mxu0 %v111
  %599 = vmatprep.subr.bf16.mxu0 %v114
  %600 = vmatpush1.bf16.msra.mxu0 %v113
  %601 = vmatprep.subr.bf16.mxu0 %v116
  %602 = vmatpush1.bf16.msra.mxu0 %v115
  %603 = vmatprep.subr.bf16.mxu0 %v118
  %604 = vmatpush1.bf16.msra.mxu0 %v117
  %605 = vmatprep.subr.bf16.mxu0 0
  %606 = vmatpush1.bf16.msra.mxu0 0
  %607 = vmatprep.subr.bf16.mxu0 0
  %608 = vmatpush1.bf16.msra.mxu0 0
  %609 = vmatprep.subr.bf16.mxu0 0
  %610 = vmatpush1.bf16.msra.mxu0 0
  %611 = vmatprep.subr.bf16.mxu0 0
  %612 = vmatpush1.bf16.msra.mxu0 0
  %613 = vmatprep.subr.bf16.mxu0 0
  %614 = vmatpush1.bf16.msra.mxu0 0
  %615 = vmatprep.subr.bf16.mxu0 0
  %616 = vmatpush1.bf16.msra.mxu0 0
  %617 = vmatprep.subr.bf16.mxu0 0
  %618 = vmatpush1.bf16.msra.mxu0 0
  %619 = vmatprep.subr.bf16.mxu0 0
  %620 = vmatpush1.bf16.msra.mxu0 0
  %621 = vmatprep.mubr.bf16.mxu0 0
  %622 = vmatmul.mubr.bf16.gmra.mrb[0].mxu0 %v588
  %v623 = vpop.f32.mrb[0].mxu0
  %v624 = vadd.f32 0.0, %v623
  %v625 = vpop.f32.mrb[0].mxu0
  %v626 = vadd.f32 0.0, %v625
  %v627 = vpop.f32.mrb[0].mxu0
  %v628 = vpop.f32.mrb[0].mxu0
  %629 = vdwg.mxu0
  %v630 = vadd.f32 %v586, %v624
  %v631 = vadd.f32 %v587, %v626
  %v632 = vtanh.pop %v630
  %v633 = vmul.f32 %v585, %v632
  %v634 = vmax.f32 %v631, %v569
  %v635 = vsub.f32 %v634, %v569
  %v636 = vmul.f32 %v635, 1.442695
  %v637 = vpow.pop %v636
  %v638 = vmul.f32 %v633, %v637
  %v639 = vadd.f32 %v574, %v638
  %v640 = vadd.f32 %v575, %v637
  %v641 = vrcp.pop %v640
  %v642 = vmul.f32 %v640, %v641
  %v643 = vsub.f32 2.0, %v642
  %v644 = vmul.f32 %v641, %v643
  %v645 = vmul.f32 %v639, %v644
  %v646 = vtanh.pop %v645
  %s647 = scalar_lea.vmem %s3, 56
  %648 = vst [vmem:[%s647] sm:$0xff] %v646
  %649 = vst [vmem:[#allocation2] sm:$0xff] %v639
  %650 = vst [vmem:[#allocation3] sm:$0xff] %v640
  %651 = vst [vmem:[#allocation4] sm:$0xff] %v646
  %652 = vst [vmem:[#allocation5] sm:$0xff] %v634
  // Predicated region
  $region18: #{rwa_pallas.1} parent=0 // pred_check
    _
  $region19: #{rwa_pallas.1} parent=0 // pred_check_branch
    %654 = sbr.rel (0) target = $region21
  $region20: #{rwa_pallas.1} parent=0 // pred_region
    _
  $region21: #{rwa_pallas.1} parent=0 // pred_fallthru
    _
  // Predicated region
  $region22: #{rwa_pallas.1} parent=0 // pred_check
    _
  $region23: #{rwa_pallas.1} parent=0 // pred_check_branch
    %656 = sbr.rel (0) target = $region25
  $region24: #{rwa_pallas.1} parent=0 // pred_region
    _
  $region25: #{rwa_pallas.1} parent=0 // pred_fallthru
    _

// kernel: rwa_pallas.1
$region0: #{rwa_pallas.1}
  #allocation0 [shape = 'u32[]', space=smem, size = 0x4, offset = 0x4, fixed_abs, tag = 'smem constant byte address 0x4 - core index']
  #allocation1 [shape = 'u32[144,128]{1,0:T(1,128)}', space=vmem, size = 0x12000, scoped, tag = 'internal scratch']
  #allocation2 [shape = 'f32[8,128]{1,0:T(8,128)}', space=vmem, size = 0x1000, scoped, tag = 'scratch operand']
  #allocation3 [shape = 'f32[8,128]{1,0:T(8,128)}', space=vmem, size = 0x1000, scoped, tag = 'scratch operand']
  #allocation4 [shape = 'f32[8,128]{1,0:T(8,128)}', space=vmem, size = 0x1000, scoped, tag = 'scratch operand']
  #allocation5 [shape = 'f32[8,128]{1,0:T(8,128)}', space=vmem, size = 0x1000, scoped, tag = 'scratch operand']
  %s0 = inlined_call_operand.vmem [shape: f32[8,8,384], index: 0, kind: input, shape index: {}]
  %s1 = inlined_call_operand.vmem [shape: bf16[128,256], index: 1, kind: input, shape index: {}]
  %s2 = inlined_call_operand.vmem [shape: f32[1,128], index: 2, kind: input, shape index: {}]
  %s3 = inlined_call_operand.vmem [shape: f32[8,8,128], index: 3, kind: output, shape index: {}]
  %s4 = sld [smem:[#allocation0]]
  $region26: #{rwa_pallas.1} parent=0
    _
  %s6 = ssub.s32 1, %s4
  %s7 = scalar_select 0, %s6, %s4
  // Predicated region
  $region2: #{rwa_pallas.1} parent=0 // pred_check
    _
  $region3: #{rwa_pallas.1} parent=0 // pred_check_branch
    %9 = sbr.rel (0) target = $region5
  $region4: #{rwa_pallas.1} parent=0 // pred_region
    _
  $region5: #{rwa_pallas.1} parent=0 // pred_fallthru
    _
  // Predicated region
  $region6: #{rwa_pallas.1} parent=0 // pred_check
    _
  $region7: #{rwa_pallas.1} parent=0 // pred_check_branch
    %11 = sbr.rel (0) target = $region9
  $region8: #{rwa_pallas.1} parent=0 // pred_region
    _
  $region9: #{rwa_pallas.1} parent=0 // pred_fallthru
    _
  // Predicated region
  $region10: #{rwa_pallas.1} parent=0 // pred_check
    _
  $region11: #{rwa_pallas.1} parent=0 // pred_check_branch
    %13 = sbr.rel (0) target = $region13
  $region12: #{rwa_pallas.1} parent=0 // pred_region
    _
  $region13: #{rwa_pallas.1} parent=0 // pred_fallthru
    _
  %p15 = scmp.eq.s32.totalorder 0, 0
  // Predicated region
  $region14: #{rwa_pallas.1} parent=0 // pred_check
    %p16 = pneg %p15
  $region15: #{rwa_pallas.1} parent=0 // pred_check_branch
    %18 = sbr.rel (%p16) target = $region17
  $region16: #{rwa_pallas.1} parent=0 // pred_region
    %v19 = vld [vmem:[%s2] sm:$0x1]
    %v21 = vlaneseq
    %v22 = vshrl.u32 %v21, 7
    %v23 = vsub.s32 0, %v22
    %v24 = vrot.slane %v19, %v23
    %v26 = vtanh.pop %v24
    %27 = vst [vmem:[#allocation4] sm:$0xff] %v26
    %28 = vst [vmem:[#allocation2] sm:$0xff] 0.0
    %29 = vst [vmem:[#allocation3] sm:$0xff] 0.0
    %30 = vst [vmem:[#allocation5] sm:$0xff] 1e-38
  $region17: #{rwa_pallas.1} parent=0 // pred_fallthru
    _
  %v31 = vld [vmem:[%s1] sm:$0xff]
  %v32 = vld [vmem:[%s1 + $0x8] sm:$0xff]
  %v33 = vld [vmem:[%s1 + $0x10] sm:$0xff]
  %v34 = vld [vmem:[%s1 + $0x18] sm:$0xff]
  %v35 = vld [vmem:[%s1 + $0x20] sm:$0xff]
  %v36 = vld [vmem:[%s1 + $0x28] sm:$0xff]
  %v37 = vld [vmem:[%s1 + $0x30] sm:$0xff]
  %v38 = vld [vmem:[%s1 + $0x38] sm:$0xff]
  %v39 = vld [vmem:[%s1 + $0x40] sm:$0xff]
  %v40 = vld [vmem:[%s1 + $0x48] sm:$0xff]
  %v41 = vld [vmem:[%s1 + $0x50] sm:$0xff]
  %v42 = vld [vmem:[%s1 + $0x58] sm:$0xff]
  %v43 = vld [vmem:[%s1 + $0x60] sm:$0xff]
  %v44 = vld [vmem:[%s1 + $0x68] sm:$0xff]
  %v45 = vld [vmem:[%s1 + $0x70] sm:$0xff]
  %v46 = vld [vmem:[%s1 + $0x78] sm:$0xff]
  %v47 = vld [vmem:[#allocation2] sm:$0xff]
  %v48 = vld [vmem:[#allocation3] sm:$0xff]
  %v49 = vld [vmem:[#allocation4] sm:$0xff]
  %v50 = vld [vmem:[#allocation5] sm:$0xff]
  %v51 = vld [vmem:[%s0] sm:$0xff]
  %v52 = vld [vmem:[%s0 + $0x8] sm:$0xff]
  %v53 = vld [vmem:[%s0 + $0x10] sm:$0xff]
  %v54 = vpack.c.bf16 %v49, %v49
  %v71 = vunpack.c.l.b16 %v31
  %v72 = vunpack.c.h.b16 %v31
  %v73 = vunpack.c.l.b16 %v32
  %v74 = vunpack.c.h.b16 %v32
  %v75 = vunpack.c.l.b16 %v33
  %v76 = vunpack.c.h.b16 %v33
  %v77 = vunpack.c.l.b16 %v34
  %v78 = vunpack.c.h.b16 %v34
  %v79 = vunpack.c.l.b16 %v35
  %v80 = vunpack.c.h.b16 %v35
  %v81 = vunpack.c.l.b16 %v36
  %v82 = vunpack.c.h.b16 %v36
  %v83 = vunpack.c.l.b16 %v37
  %v84 = vunpack.c.h.b16 %v37
  %v85 = vunpack.c.l.b16 %v38
  %v86 = vunpack.c.h.b16 %v38
  %v87 = vunpack.c.l.b16 %v39
  %v88 = vunpack.c.h.b16 %v39
  %v89 = vunpack.c.l.b16 %v40
  %v90 = vunpack.c.h.b16 %v40
  %v91 = vunpack.c.l.b16 %v41
  %v92 = vunpack.c.h.b16 %v41
  %v93 = vunpack.c.l.b16 %v42
  %v94 = vunpack.c.h.b16 %v42
  %v95 = vunpack.c.l.b16 %v43
  %v96 = vunpack.c.h.b16 %v43
  %v97 = vunpack.c.l.b16 %v44
  %v98 = vunpack.c.h.b16 %v44
  %v99 = vunpack.c.l.b16 %v45
  %v100 = vunpack.c.h.b16 %v45
  %v101 = vunpack.c.l.b16 %v46
  %v102 = vunpack.c.h.b16 %v46
  %v103 = vpack.c.b16 %v73, %v71
  %v104 = vpack.c.b16 %v74, %v72
  %v105 = vpack.c.b16 %v77, %v75
  %v106 = vpack.c.b16 %v78, %v76
  %v107 = vpack.c.b16 %v81, %v79
  %v108 = vpack.c.b16 %v82, %v80
  %v109 = vpack.c.b16 %v85, %v83
  %v110 = vpack.c.b16 %v86, %v84
  %v111 = vpack.c.b16 %v89, %v87
  %v112 = vpack.c.b16 %v90, %v88
  %v113 = vpack.c.b16 %v93, %v91
  %v114 = vpack.c.b16 %v94, %v92
  %v115 = vpack.c.b16 %v97, %v95
  %v116 = vpack.c.b16 %v98, %v96
  %v117 = vpack.c.b16 %v101, %v99
  %v118 = vpack.c.b16 %v102, %v100
  %135 = vmatprep.subr.bf16.mxu0 %v104
  %136 = vmatpush1.bf16.msra.mxu0 %v103
  %137 = vmatprep.subr.bf16.mxu0 %v106
  %138 = vmatpush1.bf16.msra.mxu0 %v105
  %139 = vmatprep.subr.bf16.mxu0 %v108
  %140 = vmatpush1.bf16.msra.mxu0 %v107
  %141 = vmatprep.subr.bf16.mxu0 %v110
  %142 = vmatpush1.bf16.msra.mxu0 %v109
  %143 = vmatprep.subr.bf16.mxu0 %v112
  %144 = vmatpush1.bf16.msra.mxu0 %v111
  %145 = vmatprep.subr.bf16.mxu0 %v114
  %146 = vmatpush1.bf16.msra.mxu0 %v113
  %147 = vmatprep.subr.bf16.mxu0 %v116
  %148 = vmatpush1.bf16.msra.mxu0 %v115
  %149 = vmatprep.subr.bf16.mxu0 %v118
  %150 = vmatpush1.bf16.msra.mxu0 %v117
  %151 = vmatprep.subr.bf16.mxu0 0
  %152 = vmatpush1.bf16.msra.mxu0 0
  %153 = vmatprep.subr.bf16.mxu0 0
  %154 = vmatpush1.bf16.msra.mxu0 0
  %155 = vmatprep.subr.bf16.mxu0 0
  %156 = vmatpush1.bf16.msra.mxu0 0
  %157 = vmatprep.subr.bf16.mxu0 0
  %158 = vmatpush1.bf16.msra.mxu0 0
  %159 = vmatprep.subr.bf16.mxu0 0
  %160 = vmatpush1.bf16.msra.mxu0 0
  %161 = vmatprep.subr.bf16.mxu0 0
  %162 = vmatpush1.bf16.msra.mxu0 0
  %163 = vmatprep.subr.bf16.mxu0 0
  %164 = vmatpush1.bf16.msra.mxu0 0
  %165 = vmatprep.subr.bf16.mxu0 0
  %166 = vmatpush1.bf16.msra.mxu0 0
  %167 = vmatprep.mubr.bf16.mxu0 0
  %168 = vmatmul.mubr.bf16.gmra.mrb[0].mxu0 %v54
  %v169 = vpop.f32.mrb[0].mxu0
  %v170 = vadd.f32 0.0, %v169
  %v171 = vpop.f32.mrb[0].mxu0
  %v172 = vadd.f32 0.0, %v171
  %v173 = vpop.f32.mrb[0].mxu0
  %v174 = vpop.f32.mrb[0].mxu0
  %175 = vdwg.mxu0
  %v176 = vadd.f32 %v52, %v170
  %v177 = vadd.f32 %v53, %v172
  %v178 = vtanh.pop %v176
  %v179 = vmul.f32 %v51, %v178
  %v180 = vmax.f32 %v177, %v50
  %v181 = vsub.f32 %v180, %v50
  %v182 = vmul.f32 %v181, 1.442695
  %v183 = vpow.pop %v182
  %v184 = vmul.f32 %v179, %v183
  %v185 = vadd.f32 %v47, %v184
  %v186 = vadd.f32 %v48, %v183
  %v187 = vrcp.pop %v186
  %v188 = vmul.f32 %v186, %v187
  %v189 = vsub.f32 2.0, %v188
  %v190 = vmul.f32 %v187, %v189
  %v191 = vmul.f32 %v185, %v190
  %v192 = vtanh.pop %v191
  %193 = vst [vmem:[%s3] sm:$0xff] %v192
  %s194 = scalar_lea.vmem %s0, 24
  %v195 = vld [vmem:[%s194] sm:$0xff]
  %v196 = vld [vmem:[%s194 + $0x8] sm:$0xff]
  %v197 = vld [vmem:[%s194 + $0x10] sm:$0xff]
  %v198 = vpack.c.bf16 %v192, %v192
  %199 = vmatprep.subr.bf16.mxu0 %v104
  %200 = vmatpush1.bf16.msra.mxu0 %v103
  %201 = vmatprep.subr.bf16.mxu0 %v106
  %202 = vmatpush1.bf16.msra.mxu0 %v105
  %203 = vmatprep.subr.bf16.mxu0 %v108
  %204 = vmatpush1.bf16.msra.mxu0 %v107
  %205 = vmatprep.subr.bf16.mxu0 %v110
  %206 = vmatpush1.bf16.msra.mxu0 %v109
  %207 = vmatprep.subr.bf16.mxu0 %v112
  %208 = vmatpush1.bf16.msra.mxu0 %v111
  %209 = vmatprep.subr.bf16.mxu0 %v114
  %210 = vmatpush1.bf16.msra.mxu0 %v113
  %211 = vmatprep.subr.bf16.mxu0 %v116
  %212 = vmatpush1.bf16.msra.mxu0 %v115
  %213 = vmatprep.subr.bf16.mxu0 %v118
  %214 = vmatpush1.bf16.msra.mxu0 %v117
  %215 = vmatprep.subr.bf16.mxu0 0
  %216 = vmatpush1.bf16.msra.mxu0 0
  %217 = vmatprep.subr.bf16.mxu0 0
  %218 = vmatpush1.bf16.msra.mxu0 0
  %219 = vmatprep.subr.bf16.mxu0 0
  %220 = vmatpush1.bf16.msra.mxu0 0
  %221 = vmatprep.subr.bf16.mxu0 0
  %222 = vmatpush1.bf16.msra.mxu0 0
  %223 = vmatprep.subr.bf16.mxu0 0
  %224 = vmatpush1.bf16.msra.mxu0 0
  %225 = vmatprep.subr.bf16.mxu0 0
  %226 = vmatpush1.bf16.msra.mxu0 0
  %227 = vmatprep.subr.bf16.mxu0 0
  %228 = vmatpush1.bf16.msra.mxu0 0
  %229 = vmatprep.subr.bf16.mxu0 0
  %230 = vmatpush1.bf16.msra.mxu0 0
  %231 = vmatprep.mubr.bf16.mxu0 0
  %232 = vmatmul.mubr.bf16.gmra.mrb[0].mxu0 %v198
  %v233 = vpop.f32.mrb[0].mxu0
  %v234 = vadd.f32 0.0, %v233
  %v235 = vpop.f32.mrb[0].mxu0
  %v236 = vadd.f32 0.0, %v235
  %v237 = vpop.f32.mrb[0].mxu0
  %v238 = vpop.f32.mrb[0].mxu0
  %239 = vdwg.mxu0
  %v240 = vadd.f32 %v196, %v234
  %v241 = vadd.f32 %v197, %v236
  %v242 = vtanh.pop %v240
  %v243 = vmul.f32 %v195, %v242
  %v244 = vmax.f32 %v241, %v180
  %v245 = vsub.f32 %v244, %v180
  %v246 = vmul.f32 %v245, 1.442695
  %v247 = vpow.pop %v246
  %v248 = vmul.f32 %v243, %v247
  %v249 = vadd.f32 %v185, %v248
  %v250 = vadd.f32 %v186, %v247
  %v251 = vrcp.pop %v250
  %v252 = vmul.f32 %v250, %v251
  %v253 = vsub.f32 2.0, %v252
  %v254 = vmul.f32 %v251, %v253
  %v255 = vmul.f32 %v249, %v254
  %v256 = vtanh.pop %v255
  %s257 = scalar_lea.vmem %s3, 8
  %258 = vst [vmem:[%s257] sm:$0xff] %v256
  %s259 = scalar_lea.vmem %s0, 48
  %v260 = vld [vmem:[%s259] sm:$0xff]
  %v261 = vld [vmem:[%s259 + $0x8] sm:$0xff]
  %v262 = vld [vmem:[%s259 + $0x10] sm:$0xff]
  %v263 = vpack.c.bf16 %v256, %v256
  %264 = vmatprep.subr.bf16.mxu0 %v104
  %265 = vmatpush1.bf16.msra.mxu0 %v103
  %266 = vmatprep.subr.bf16.mxu0 %v106
  %267 = vmatpush1.bf16.msra.mxu0 %v105
  %268 = vmatprep.subr.bf16.mxu0 %v108
  %269 = vmatpush1.bf16.msra.mxu0 %v107
  %270 = vmatprep.subr.bf16.mxu0 %v110
  %271 = vmatpush1.bf16.msra.mxu0 %v109
  %272 = vmatprep.subr.bf16.mxu0 %v112
  %273 = vmatpush1.bf16.msra.mxu0 %v111
  %274 = vmatprep.subr.bf16.mxu0 %v114
  %275 = vmatpush1.bf16.msra.mxu0 %v113
  %276 = vmatprep.subr.bf16.mxu0 %v116
  %277 = vmatpush1.bf16.msra.mxu0 %v115
  %278 = vmatprep.subr.bf16.mxu0 %v118
  %279 = vmatpush1.bf16.msra.mxu0 %v117
  %280 = vmatprep.subr.bf16.mxu0 0
  %281 = vmatpush1.bf16.msra.mxu0 0
  %282 = vmatprep.subr.bf16.mxu0 0
  %283 = vmatpush1.bf16.msra.mxu0 0
  %284 = vmatprep.subr.bf16.mxu0 0
  %285 = vmatpush1.bf16.msra.mxu0 0
  %286 = vmatprep.subr.bf16.mxu0 0
  %287 = vmatpush1.bf16.msra.mxu0 0
  %288 = vmatprep.subr.bf16.mxu0 0
  %289 = vmatpush1.bf16.msra.mxu0 0
  %290 = vmatprep.subr.bf16.mxu0 0
  %291 = vmatpush1.bf16.msra.mxu0 0
  %292 = vmatprep.subr.bf16.mxu0 0
  %293 = vmatpush1.bf16.msra.mxu0 0
  %294 = vmatprep.subr.bf16.mxu0 0
  %295 = vmatpush1.bf16.msra.mxu0 0
  %296 = vmatprep.mubr.bf16.mxu0 0
  %297 = vmatmul.mubr.bf16.gmra.mrb[0].mxu0 %v263
  %v298 = vpop.f32.mrb[0].mxu0
  %v299 = vadd.f32 0.0, %v298
  %v300 = vpop.f32.mrb[0].mxu0
  %v301 = vadd.f32 0.0, %v300
  %v302 = vpop.f32.mrb[0].mxu0
  %v303 = vpop.f32.mrb[0].mxu0
  %304 = vdwg.mxu0
  %v305 = vadd.f32 %v261, %v299
  %v306 = vadd.f32 %v262, %v301
  %v307 = vtanh.pop %v305
  %v308 = vmul.f32 %v260, %v307
  %v309 = vmax.f32 %v306, %v244
  %v310 = vsub.f32 %v309, %v244
  %v311 = vmul.f32 %v310, 1.442695
  %v312 = vpow.pop %v311
  %v313 = vmul.f32 %v308, %v312
  %v314 = vadd.f32 %v249, %v313
  %v315 = vadd.f32 %v250, %v312
  %v316 = vrcp.pop %v315
  %v317 = vmul.f32 %v315, %v316
  %v318 = vsub.f32 2.0, %v317
  %v319 = vmul.f32 %v316, %v318
  %v320 = vmul.f32 %v314, %v319
  %v321 = vtanh.pop %v320
  %s322 = scalar_lea.vmem %s3, 16
  %323 = vst [vmem:[%s322] sm:$0xff] %v321
  %s324 = scalar_lea.vmem %s0, 72
  %v325 = vld [vmem:[%s324] sm:$0xff]
  %v326 = vld [vmem:[%s324 + $0x8] sm:$0xff]
  %v327 = vld [vmem:[%s324 + $0x10] sm:$0xff]
  %v328 = vpack.c.bf16 %v321, %v321
  %329 = vmatprep.subr.bf16.mxu0 %v104
  %330 = vmatpush1.bf16.msra.mxu0 %v103
  %331 = vmatprep.subr.bf16.mxu0 %v106
  %332 = vmatpush1.bf16.msra.mxu0 %v105
  %333 = vmatprep.subr.bf16.mxu0 %v108
  %334 = vmatpush1.bf16.msra.mxu0 %v107
  %335 = vmatprep.subr.bf16.mxu0 %v110
  %336 = vmatpush1.bf16.msra.mxu0 %v109
  %337 = vmatprep.subr.bf16.mxu0 %v112
  %338 = vmatpush1.bf16.msra.mxu0 %v111
  %339 = vmatprep.subr.bf16.mxu0 %v114
  %340 = vmatpush1.bf16.msra.mxu0 %v113
  %341 = vmatprep.subr.bf16.mxu0 %v116
  %342 = vmatpush1.bf16.msra.mxu0 %v115
  %343 = vmatprep.subr.bf16.mxu0 %v118
  %344 = vmatpush1.bf16.msra.mxu0 %v117
  %345 = vmatprep.subr.bf16.mxu0 0
  %346 = vmatpush1.bf16.msra.mxu0 0
  %347 = vmatprep.subr.bf16.mxu0 0
  %348 = vmatpush1.bf16.msra.mxu0 0
  %349 = vmatprep.subr.bf16.mxu0 0
  %350 = vmatpush1.bf16.msra.mxu0 0
  %351 = vmatprep.subr.bf16.mxu0 0
  %352 = vmatpush1.bf16.msra.mxu0 0
  %353 = vmatprep.subr.bf16.mxu0 0
  %354 = vmatpush1.bf16.msra.mxu0 0
  %355 = vmatprep.subr.bf16.mxu0 0
  %356 = vmatpush1.bf16.msra.mxu0 0
  %357 = vmatprep.subr.bf16.mxu0 0
  %358 = vmatpush1.bf16.msra.mxu0 0
  %359 = vmatprep.subr.bf16.mxu0 0
  %360 = vmatpush1.bf16.msra.mxu0 0
  %361 = vmatprep.mubr.bf16.mxu0 0
  %362 = vmatmul.mubr.bf16.gmra.mrb[0].mxu0 %v328
  %v363 = vpop.f32.mrb[0].mxu0
  %v364 = vadd.f32 0.0, %v363
  %v365 = vpop.f32.mrb[0].mxu0
  %v366 = vadd.f32 0.0, %v365
  %v367 = vpop.f32.mrb[0].mxu0
  %v368 = vpop.f32.mrb[0].mxu0
  %369 = vdwg.mxu0
  %v370 = vadd.f32 %v326, %v364
  %v371 = vadd.f32 %v327, %v366
  %v372 = vtanh.pop %v370
  %v373 = vmul.f32 %v325, %v372
  %v374 = vmax.f32 %v371, %v309
  %v375 = vsub.f32 %v374, %v309
  %v376 = vmul.f32 %v375, 1.442695
  %v377 = vpow.pop %v376
  %v378 = vmul.f32 %v373, %v377
  %v379 = vadd.f32 %v314, %v378
  %v380 = vadd.f32 %v315, %v377
  %v381 = vrcp.pop %v380
  %v382 = vmul.f32 %v380, %v381
  %v383 = vsub.f32 2.0, %v382
  %v384 = vmul.f32 %v381, %v383
  %v385 = vmul.f32 %v379, %v384
  %v386 = vtanh.pop %v385
  %s387 = scalar_lea.vmem %s3, 24
  %388 = vst [vmem:[%s387] sm:$0xff] %v386
  %s389 = scalar_lea.vmem %s0, 96
  %v390 = vld [vmem:[%s389] sm:$0xff]
  %v391 = vld [vmem:[%s389 + $0x8] sm:$0xff]
  %v392 = vld [vmem:[%s389 + $0x10] sm:$0xff]
  %v393 = vpack.c.bf16 %v386, %v386
  %394 = vmatprep.subr.bf16.mxu0 %v104
  %395 = vmatpush1.bf16.msra.mxu0 %v103
  %396 = vmatprep.subr.bf16.mxu0 %v106
  %397 = vmatpush1.bf16.msra.mxu0 %v105
  %398 = vmatprep.subr.bf16.mxu0 %v108
  %399 = vmatpush1.bf16.msra.mxu0 %v107
  %400 = vmatprep.subr.bf16.mxu0 %v110
  %401 = vmatpush1.bf16.msra.mxu0 %v109
  %402 = vmatprep.subr.bf16.mxu0 %v112
  %403 = vmatpush1.bf16.msra.mxu0 %v111
  %404 = vmatprep.subr.bf16.mxu0 %v114
  %405 = vmatpush1.bf16.msra.mxu0 %v113
  %406 = vmatprep.subr.bf16.mxu0 %v116
  %407 = vmatpush1.bf16.msra.mxu0 %v115
  %408 = vmatprep.subr.bf16.mxu0 %v118
  %409 = vmatpush1.bf16.msra.mxu0 %v117
  %410 = vmatprep.subr.bf16.mxu0 0
  %411 = vmatpush1.bf16.msra.mxu0 0
  %412 = vmatprep.subr.bf16.mxu0 0
  %413 = vmatpush1.bf16.msra.mxu0 0
  %414 = vmatprep.subr.bf16.mxu0 0
  %415 = vmatpush1.bf16.msra.mxu0 0
  %416 = vmatprep.subr.bf16.mxu0 0
  %417 = vmatpush1.bf16.msra.mxu0 0
  %418 = vmatprep.subr.bf16.mxu0 0
  %419 = vmatpush1.bf16.msra.mxu0 0
  %420 = vmatprep.subr.bf16.mxu0 0
  %421 = vmatpush1.bf16.msra.mxu0 0
  %422 = vmatprep.subr.bf16.mxu0 0
  %423 = vmatpush1.bf16.msra.mxu0 0
  %424 = vmatprep.subr.bf16.mxu0 0
  %425 = vmatpush1.bf16.msra.mxu0 0
  %426 = vmatprep.mubr.bf16.mxu0 0
  %427 = vmatmul.mubr.bf16.gmra.mrb[0].mxu0 %v393
  %v428 = vpop.f32.mrb[0].mxu0
  %v429 = vadd.f32 0.0, %v428
  %v430 = vpop.f32.mrb[0].mxu0
  %v431 = vadd.f32 0.0, %v430
  %v432 = vpop.f32.mrb[0].mxu0
  %v433 = vpop.f32.mrb[0].mxu0
  %434 = vdwg.mxu0
  %v435 = vadd.f32 %v391, %v429
  %v436 = vadd.f32 %v392, %v431
  %v437 = vtanh.pop %v435
  %v438 = vmul.f32 %v390, %v437
  %v439 = vmax.f32 %v436, %v374
  %v440 = vsub.f32 %v439, %v374
  %v441 = vmul.f32 %v440, 1.442695
  %v442 = vpow.pop %v441
  %v443 = vmul.f32 %v438, %v442
  %v444 = vadd.f32 %v379, %v443
  %v445 = vadd.f32 %v380, %v442
  %v446 = vrcp.pop %v445
  %v447 = vmul.f32 %v445, %v446
  %v448 = vsub.f32 2.0, %v447
  %v449 = vmul.f32 %v446, %v448
  %v450 = vmul.f32 %v444, %v449
  %v451 = vtanh.pop %v450
  %s452 = scalar_lea.vmem %s3, 32
  %453 = vst [vmem:[%s452] sm:$0xff] %v451
  %s454 = scalar_lea.vmem %s0, 120
  %v455 = vld [vmem:[%s454] sm:$0xff]
  %v456 = vld [vmem:[%s454 + $0x8] sm:$0xff]
  %v457 = vld [vmem:[%s454 + $0x10] sm:$0xff]
  %v458 = vpack.c.bf16 %v451, %v451
  %459 = vmatprep.subr.bf16.mxu0 %v104
  %460 = vmatpush1.bf16.msra.mxu0 %v103
  %461 = vmatprep.subr.bf16.mxu0 %v106
  %462 = vmatpush1.bf16.msra.mxu0 %v105
  %463 = vmatprep.subr.bf16.mxu0 %v108
  %464 = vmatpush1.bf16.msra.mxu0 %v107
  %465 = vmatprep.subr.bf16.mxu0 %v110
  %466 = vmatpush1.bf16.msra.mxu0 %v109
  %467 = vmatprep.subr.bf16.mxu0 %v112
  %468 = vmatpush1.bf16.msra.mxu0 %v111
  %469 = vmatprep.subr.bf16.mxu0 %v114
  %470 = vmatpush1.bf16.msra.mxu0 %v113
  %471 = vmatprep.subr.bf16.mxu0 %v116
  %472 = vmatpush1.bf16.msra.mxu0 %v115
  %473 = vmatprep.subr.bf16.mxu0 %v118
  %474 = vmatpush1.bf16.msra.mxu0 %v117
  %475 = vmatprep.subr.bf16.mxu0 0
  %476 = vmatpush1.bf16.msra.mxu0 0
  %477 = vmatprep.subr.bf16.mxu0 0
  %478 = vmatpush1.bf16.msra.mxu0 0
  %479 = vmatprep.subr.bf16.mxu0 0
  %480 = vmatpush1.bf16.msra.mxu0 0
  %481 = vmatprep.subr.bf16.mxu0 0
  %482 = vmatpush1.bf16.msra.mxu0 0
  %483 = vmatprep.subr.bf16.mxu0 0
  %484 = vmatpush1.bf16.msra.mxu0 0
  %485 = vmatprep.subr.bf16.mxu0 0
  %486 = vmatpush1.bf16.msra.mxu0 0
  %487 = vmatprep.subr.bf16.mxu0 0
  %488 = vmatpush1.bf16.msra.mxu0 0
  %489 = vmatprep.subr.bf16.mxu0 0
  %490 = vmatpush1.bf16.msra.mxu0 0
  %491 = vmatprep.mubr.bf16.mxu0 0
  %492 = vmatmul.mubr.bf16.gmra.mrb[0].mxu0 %v458
  %v493 = vpop.f32.mrb[0].mxu0
  %v494 = vadd.f32 0.0, %v493
  %v495 = vpop.f32.mrb[0].mxu0
  %v496 = vadd.f32 0.0, %v495
  %v497 = vpop.f32.mrb[0].mxu0
  %v498 = vpop.f32.mrb[0].mxu0
  %499 = vdwg.mxu0
  %v500 = vadd.f32 %v456, %v494
  %v501 = vadd.f32 %v457, %v496
  %v502 = vtanh.pop %v500
  %v503 = vmul.f32 %v455, %v502
  %v504 = vmax.f32 %v501, %v439
  %v505 = vsub.f32 %v504, %v439
  %v506 = vmul.f32 %v505, 1.442695
  %v507 = vpow.pop %v506
  %v508 = vmul.f32 %v503, %v507
  %v509 = vadd.f32 %v444, %v508
  %v510 = vadd.f32 %v445, %v507
  %v511 = vrcp.pop %v510
  %v512 = vmul.f32 %v510, %v511
  %v513 = vsub.f32 2.0, %v512
  %v514 = vmul.f32 %v511, %v513
  %v515 = vmul.f32 %v509, %v514
  %v516 = vtanh.pop %v515
  %s517 = scalar_lea.vmem %s3, 40
  %518 = vst [vmem:[%s517] sm:$0xff] %v516
  %s519 = scalar_lea.vmem %s0, 144
  %v520 = vld [vmem:[%s519] sm:$0xff]
  %v521 = vld [vmem:[%s519 + $0x8] sm:$0xff]
  %v522 = vld [vmem:[%s519 + $0x10] sm:$0xff]
  %v523 = vpack.c.bf16 %v516, %v516
  %524 = vmatprep.subr.bf16.mxu0 %v104
  %525 = vmatpush1.bf16.msra.mxu0 %v103
  %526 = vmatprep.subr.bf16.mxu0 %v106
  %527 = vmatpush1.bf16.msra.mxu0 %v105
  %528 = vmatprep.subr.bf16.mxu0 %v108
  %529 = vmatpush1.bf16.msra.mxu0 %v107
  %530 = vmatprep.subr.bf16.mxu0 %v110
  %531 = vmatpush1.bf16.msra.mxu0 %v109
  %532 = vmatprep.subr.bf16.mxu0 %v112
  %533 = vmatpush1.bf16.msra.mxu0 %v111
  %534 = vmatprep.subr.bf16.mxu0 %v114
  %535 = vmatpush1.bf16.msra.mxu0 %v113
  %536 = vmatprep.subr.bf16.mxu0 %v116
  %537 = vmatpush1.bf16.msra.mxu0 %v115
  %538 = vmatprep.subr.bf16.mxu0 %v118
  %539 = vmatpush1.bf16.msra.mxu0 %v117
  %540 = vmatprep.subr.bf16.mxu0 0
  %541 = vmatpush1.bf16.msra.mxu0 0
  %542 = vmatprep.subr.bf16.mxu0 0
  %543 = vmatpush1.bf16.msra.mxu0 0
  %544 = vmatprep.subr.bf16.mxu0 0
  %545 = vmatpush1.bf16.msra.mxu0 0
  %546 = vmatprep.subr.bf16.mxu0 0
  %547 = vmatpush1.bf16.msra.mxu0 0
  %548 = vmatprep.subr.bf16.mxu0 0
  %549 = vmatpush1.bf16.msra.mxu0 0
  %550 = vmatprep.subr.bf16.mxu0 0
  %551 = vmatpush1.bf16.msra.mxu0 0
  %552 = vmatprep.subr.bf16.mxu0 0
  %553 = vmatpush1.bf16.msra.mxu0 0
  %554 = vmatprep.subr.bf16.mxu0 0
  %555 = vmatpush1.bf16.msra.mxu0 0
  %556 = vmatprep.mubr.bf16.mxu0 0
  %557 = vmatmul.mubr.bf16.gmra.mrb[0].mxu0 %v523
  %v558 = vpop.f32.mrb[0].mxu0
  %v559 = vadd.f32 0.0, %v558
  %v560 = vpop.f32.mrb[0].mxu0
  %v561 = vadd.f32 0.0, %v560
  %v562 = vpop.f32.mrb[0].mxu0
  %v563 = vpop.f32.mrb[0].mxu0
  %564 = vdwg.mxu0
  %v565 = vadd.f32 %v521, %v559
  %v566 = vadd.f32 %v522, %v561
  %v567 = vtanh.pop %v565
  %v568 = vmul.f32 %v520, %v567
  %v569 = vmax.f32 %v566, %v504
  %v570 = vsub.f32 %v569, %v504
  %v571 = vmul.f32 %v570, 1.442695
  %v572 = vpow.pop %v571
  %v573 = vmul.f32 %v568, %v572
  %v574 = vadd.f32 %v509, %v573
  %v575 = vadd.f32 %v510, %v572
  %v576 = vrcp.pop %v575
  %v577 = vmul.f32 %v575, %v576
  %v578 = vsub.f32 2.0, %v577
  %v579 = vmul.f32 %v576, %v578
  %v580 = vmul.f32 %v574, %v579
  %v581 = vtanh.pop %v580
  %s582 = scalar_lea.vmem %s3, 48
  %583 = vst [vmem:[%s582] sm:$0xff] %v581
  %s584 = scalar_lea.vmem %s0, 168
  %v585 = vld [vmem:[%s584] sm:$0xff]
  %v586 = vld [vmem:[%s584 + $0x8] sm:$0xff]
  %v587 = vld [vmem:[%s584 + $0x10] sm:$0xff]
  %v588 = vpack.c.bf16 %v581, %v581
  %589 = vmatprep.subr.bf16.mxu0 %v104
  %590 = vmatpush1.bf16.msra.mxu0 %v103
  %591 = vmatprep.subr.bf16.mxu0 %v106
  %592 = vmatpush1.bf16.msra.mxu0 %v105
  %593 = vmatprep.subr.bf16.mxu0 %v108
  %594 = vmatpush1.bf16.msra.mxu0 %v107
  %595 = vmatprep.subr.bf16.mxu0 %v110
  %596 = vmatpush1.bf16.msra.mxu0 %v109
  %597 = vmatprep.subr.bf16.mxu0 %v112
  %598 = vmatpush1.bf16.msra.mxu0 %v111
  %599 = vmatprep.subr.bf16.mxu0 %v114
  %600 = vmatpush1.bf16.msra.mxu0 %v113
  %601 = vmatprep.subr.bf16.mxu0 %v116
  %602 = vmatpush1.bf16.msra.mxu0 %v115
  %603 = vmatprep.subr.bf16.mxu0 %v118
  %604 = vmatpush1.bf16.msra.mxu0 %v117
  %605 = vmatprep.subr.bf16.mxu0 0
  %606 = vmatpush1.bf16.msra.mxu0 0
  %607 = vmatprep.subr.bf16.mxu0 0
  %608 = vmatpush1.bf16.msra.mxu0 0
  %609 = vmatprep.subr.bf16.mxu0 0
  %610 = vmatpush1.bf16.msra.mxu0 0
  %611 = vmatprep.subr.bf16.mxu0 0
  %612 = vmatpush1.bf16.msra.mxu0 0
  %613 = vmatprep.subr.bf16.mxu0 0
  %614 = vmatpush1.bf16.msra.mxu0 0
  %615 = vmatprep.subr.bf16.mxu0 0
  %616 = vmatpush1.bf16.msra.mxu0 0
  %617 = vmatprep.subr.bf16.mxu0 0
  %618 = vmatpush1.bf16.msra.mxu0 0
  %619 = vmatprep.subr.bf16.mxu0 0
  %620 = vmatpush1.bf16.msra.mxu0 0
  %621 = vmatprep.mubr.bf16.mxu0 0
  %622 = vmatmul.mubr.bf16.gmra.mrb[0].mxu0 %v588
  %v623 = vpop.f32.mrb[0].mxu0
  %v624 = vadd.f32 0.0, %v623
  %v625 = vpop.f32.mrb[0].mxu0
  %v626 = vadd.f32 0.0, %v625
  %v627 = vpop.f32.mrb[0].mxu0
  %v628 = vpop.f32.mrb[0].mxu0
  %629 = vdwg.mxu0
  %v630 = vadd.f32 %v586, %v624
  %v631 = vadd.f32 %v587, %v626
  %v632 = vtanh.pop %v630
  %v633 = vmul.f32 %v585, %v632
  %v634 = vmax.f32 %v631, %v569
  %v635 = vsub.f32 %v634, %v569
  %v636 = vmul.f32 %v635, 1.442695
  %v637 = vpow.pop %v636
  %v638 = vmul.f32 %v633, %v637
  %v639 = vadd.f32 %v574, %v638
  %v640 = vadd.f32 %v575, %v637
  %v641 = vrcp.pop %v640
  %v642 = vmul.f32 %v640, %v641
  %v643 = vsub.f32 2.0, %v642
  %v644 = vmul.f32 %v641, %v643
  %v645 = vmul.f32 %v639, %v644
  %v646 = vtanh.pop %v645
  %s647 = scalar_lea.vmem %s3, 56
  %648 = vst [vmem:[%s647] sm:$0xff] %v646
  %649 = vst [vmem:[#allocation2] sm:$0xff] %v639
  %650 = vst [vmem:[#allocation3] sm:$0xff] %v640
  %651 = vst [vmem:[#allocation4] sm:$0xff] %v646
  %652 = vst [vmem:[#allocation5] sm:$0xff] %v634
  // Predicated region
  $region18: #{rwa_pallas.1} parent=0 // pred_check
    _
  $region19: #{rwa_pallas.1} parent=0 // pred_check_branch
    %654 = sbr.rel (0) target = $region21
  $region20: #{rwa_pallas.1} parent=0 // pred_region
    _
  $region21: #{rwa_pallas.1} parent=0 // pred_fallthru
    _
  // Predicated region
  $region22: #{rwa_pallas.1} parent=0 // pred_check
    _
  $region23: #{rwa_pallas.1} parent=0 // pred_check_branch
    %656 = sbr.rel (0) target = $region25
  $region24: #{rwa_pallas.1} parent=0 // pred_region
    _
  $region25: #{rwa_pallas.1} parent=0 // pred_fallthru
    _

</llo_original>
